<compile_context>
chip_gen: v7x
topology: tpu7x:2x2x1
jax: 0.10.0
libtpu: 0.0.40
codegen_flags: <defaults>
</compile_context>

<pallas_src>
import math

import jax
import jax.numpy as jnp
from jax.experimental import pallas as pl
from jax.experimental.pallas import tpu as pltpu

D_MODEL = 32
N_HEADS = 4
HEAD_DIM = D_MODEL // N_HEADS
FFN_DIM = 64
VOCAB_SIZE = 64
NUM_LAYERS = 2
EPS = 1e-5
_SCALE = 1.0 / math.sqrt(HEAD_DIM)


def _mxu(a, b):
    # bf16 MXU inputs, f32 accumulation (v6e/v7x MXU is bf16-native; avoids the
    # multi-pass f32 emulation flagged in the review).
    return jnp.dot(a.astype(jnp.bfloat16), b.astype(jnp.bfloat16),
                   preferred_element_type=jnp.float32)


def _layer_norm(h, gamma, beta):
    mean = jnp.mean(h, axis=-1, keepdims=True)
    var = jnp.mean((h - mean) ** 2, axis=-1, keepdims=True)
    return (h - mean) * jax.lax.rsqrt(var + EPS) * gamma + beta


# ------------------------------- fused decoder kernel -------------------------------

def _make_decoder_kernel(tb, S, D, H, has_mask):
    R = tb * S          # rows (batch*seq) per grid step
    HS = H * S          # heads packed on the lane axis

    def kernel(*refs):
        if has_mask:
            (x_ref, cos_ref, sin_ref, hm_ref, g_ref, amask_ref,
             wp_ref, bp_ref, wo_ref, bo_ref, ln1g_ref, ln1b_ref,
             w1_ref, b1_ref, w2_ref, b2_ref, ln2g_ref, ln2b_ref,
             out_ref, act_ref) = refs
        else:
            (x_ref, cos_ref, sin_ref, hm_ref, g_ref,
             wp_ref, bp_ref, wo_ref, bo_ref, ln1g_ref, ln1b_ref,
             w1_ref, b1_ref, w2_ref, b2_ref, ln2g_ref, ln2b_ref,
             out_ref, act_ref) = refs
            amask_ref = None

        layer = pl.program_id(1)

        @pl.when(layer == 0)
        def _():
            # load the input tile once; it then stays VMEM-resident across all layers
            act_ref[...] = x_ref[...].astype(jnp.float32)

        x = act_ref[...]                                        # (R, D) f32

        # ---- fused projection: [q, rot_half(q), k, rot_half(k), v] in one matmul ----
        proj = _mxu(x, wp_ref[0]) + bp_ref[0]                   # (R, 5D) f32
        q, qr = proj[:, 0:D], proj[:, D:2 * D]
        k, kr = proj[:, 2 * D:3 * D], proj[:, 3 * D:4 * D]
        v = proj[:, 4 * D:5 * D]

        # ---- RoPE: pure VPU elementwise (rotate-half pre-folded into the weights) ----
        cos = cos_ref[...][None]                                # (1, S, D)
        sin = sin_ref[...][None]
        q3 = q.reshape(tb, S, D) * cos + qr.reshape(tb, S, D) * sin
        k3 = k.reshape(tb, S, D) * cos + kr.reshape(tb, S, D) * sin
        v3 = v.reshape(tb, S, D)

        # ---- attention with heads packed on the lane axis -------------------------
        # K/V expanded to (tb, H*S, D) with per-head lane masks; the score matmul then
        # has N = H*S and the PV matmul directly yields head-concatenated output.
        hm = hm_ref[...]                                        # (H*S, D) 0/1 mask
        km = jnp.concatenate([k3] * H, axis=1) * hm[None]       # (tb, H*S, D)
        vm = jnp.concatenate([v3] * H, axis=1) * hm[None]

        s = jnp.einsum("bqd,bnd->bqn",
                       q3.astype(jnp.bfloat16), km.astype(jnp.bfloat16),
                       preferred_element_type=jnp.float32) * _SCALE   # (tb, S, H*S)
        if has_mask:
            s = s + amask_ref[...][None]                        # packed (S, H*S) mask

        # per-head softmax: row-global max as the (softmax-invariant) stabilizer,
        # per-segment denominator via one tiny MXU matmul with a block-diag ones matrix.
        m = jnp.max(s, axis=-1, keepdims=True)
        e = jnp.exp(s - m)                                      # (tb, S, H*S) f32
        e2 = e.reshape(R, HS)
        denom = _mxu(e2, g_ref[...])                            # (R, H*S), per-head sums
        r0 = pl.reciprocal(denom, approx=True)                  # EUP fast path ...
        rcp = r0 * (2.0 - denom * r0)                           # ... + 1 Newton step
        p = (e2 * rcp).reshape(tb, S, HS)

        o = jnp.einsum("bqn,bnd->bqd",
                       p.astype(jnp.bfloat16), vm.astype(jnp.bfloat16),
                       preferred_element_type=jnp.float32)      # (tb, S, D), heads concat
        attn = _mxu(o.reshape(R, D), wo_ref[0]) + bo_ref[0]     # W_O projection

        h1 = _layer_norm(x + attn, ln1g_ref[0], ln1b_ref[0])    # dropout1 = identity

        ff = jnp.maximum(_mxu(h1, w1_ref[0]) + b1_ref[0], 0.0)
        ff = _mxu(ff, w2_ref[0]) + b2_ref[0]
        h2 = _layer_norm(h1 + ff, ln2g_ref[0], ln2b_ref[0])     # dropout2 = identity

        act_ref[...] = h2                                       # carry to next layer

        @pl.when(layer == pl.num_programs(1) - 1)
        def _():
            out_ref[...] = h2.astype(out_ref.dtype)

    return kernel


# ------------------------- one-time host-side preparation -------------------------

def _rotate_half_matrix(h, dh):
    half = dh // 2
    r = jnp.zeros((dh, dh), jnp.float32)
    r = r.at[half:, :half].set(-jnp.eye(half, dtype=jnp.float32))
    r = r.at[:half, half:].set(jnp.eye(half, dtype=jnp.float32))
    return jnp.kron(jnp.eye(h, dtype=jnp.float32), r)           # (D, D) signed perm


def prepare_decoder(layers_params, cos, sin, attn_mask=None):
    """One-time prep: stack per-layer weights (L, ...), fold rotate-half into the fused
    projection, pre-cast matmul weights to bf16, build head masks / segment-sum matrix,
    pack RoPE tables and the additive mask to the head-packed layout."""
    H, Dh, S = N_HEADS, HEAD_DIM, cos.shape[0]
    rot = _rotate_half_matrix(H, Dh)

    def stack(idx):
        return jnp.stack([p[idx] for p in layers_params], axis=0)

    wq, bq, wk, bk, wv, bv = (stack(i) for i in range(6))
    # fused projection [q, q@rot, k, k@rot, v]; rot is an exact signed permutation so
    # the bf16 cast commutes with the fold (no extra rounding vs the reference).
    wp = jnp.concatenate([wq, wq @ rot, wk, wk @ rot, wv], axis=2).astype(jnp.bfloat16)
    bp = jnp.concatenate([bq, bq @ rot, bk, bk @ rot, bv], axis=2)       # (L, 1, 5D) f32
    wo = stack(6).astype(jnp.bfloat16)
    bo = stack(7)
    ln1g, ln1b = stack(8), stack(9)
    w1 = stack(10).astype(jnp.bfloat16)
    b1 = stack(11)
    w2 = stack(12).astype(jnp.bfloat16)
    b2 = stack(13)
    ln2g, ln2b = stack(14), stack(15)

    cos_d = jnp.tile(cos, (1, H))                                        # (S, D)
    sin_d = jnp.tile(sin, (1, H))
    hmask = jnp.kron(jnp.eye(H, dtype=jnp.float32), jnp.ones((1, Dh), jnp.float32))
    hm = jnp.repeat(hmask, S, axis=0)                                    # (H*S, D)
    g = jnp.kron(jnp.eye(H, dtype=jnp.float32),
                 jnp.ones((S, S), jnp.float32)).astype(jnp.bfloat16)     # (H*S, H*S)
    amask = None if attn_mask is None else jnp.tile(attn_mask.astype(jnp.float32), (1, H))

    shared = (cos_d, sin_d, hm, g)
    weights = (wp, bp, wo, bo, ln1g, ln1b, w1, b1, w2, b2, ln2g, ln2b)
    return shared, weights, amask


# ------------------------------- forward wrappers -------------------------------

def roformer_layers(x, shared, weights, amask=None, block_b=None):
    """All decoder layers in one fused pallas_call.  x: (B, S, D) f32."""
    B, S, D = x.shape
    assert D == D_MODEL
    H = N_HEADS
    L = weights[0].shape[0]
    has_mask = amask is not None

    # >=2 grid steps on the row-tile axis so both v7x TensorCores get work and the
    # x-tile DMA pipelines; fall back to a single tile only when B == 1.
    if block_b is not None:
        tb = block_b
    elif B == 1:
        tb = 1
    else:
        tb = max(1, min(B // 2, max(1, 256 // S)))
        while B % tb:
            tb -= 1
    assert B % tb == 0
    R = tb * S

    x2 = x.reshape(B * S, D)

    def shared_spec(a):
        nd = a.ndim
        return pl.BlockSpec(a.shape, lambda i, l, nd=nd: (0,) * nd)

    def layer_spec(a):
        return pl.BlockSpec((1,) + a.shape[1:], lambda i, l: (l, 0, 0))

    ins = [x2, *shared]
    in_specs = [pl.BlockSpec((R, D), lambda i, l: (i, 0))] + [shared_spec(a) for a in shared]
    if has_mask:
        ins.append(amask)
        in_specs.append(shared_spec(amask))
    ins += list(weights)
    in_specs += [layer_spec(a) for a in weights]

    out = pl.pallas_call(
        _make_decoder_kernel(tb, S, D, H, has_mask),
        out_shape=jax.ShapeDtypeStruct((B * S, D), x.dtype),
        grid_spec=pltpu.PrefetchScalarGridSpec(
            num_scalar_prefetch=0,
            grid=(B // tb, L),          # layer axis innermost; activation carried in VMEM
            in_specs=in_specs,
            out_specs=pl.BlockSpec((R, D), lambda i, l: (i, 0)),
            scratch_shapes=[pltpu.VMEM((R, D), jnp.float32)],
        ),
        compiler_params=pltpu.CompilerParams(
            dimension_semantics=("parallel", "arbitrary")),
    )(*ins)
    return out.reshape(B, S, D)


def roformer_decoder(input_ids, emb_table, shared, weights, amask=None):
    x = jnp.take(emb_table, input_ids, axis=0)   # embedding lookup (XLA gather)
    # embedding dropout = identity (inference)
    return roformer_layers(x, shared, weights, amask)


# ------------------------- parameter / table setup -------------------------

def init_layer_params(key):
    ks = jax.random.split(key, 12)

    def lin(kw, kb, fi, fo):
        w = jax.random.normal(kw, (fi, fo), jnp.float32) * (1.0 / jnp.sqrt(fi))
        b = jax.random.normal(kb, (1, fo), jnp.float32) * 0.01
        return w, b

    wq, bq = lin(ks[0], ks[1], D_MODEL, D_MODEL)
    wk, bk = lin(ks[2], ks[3], D_MODEL, D_MODEL)
    wv, bv = lin(ks[4], ks[5], D_MODEL, D_MODEL)
    wo, bo = lin(ks[6], ks[7], D_MODEL, D_MODEL)       # W_O
    w1, b1 = lin(ks[8], ks[9], D_MODEL, FFN_DIM)
    w2, b2 = lin(ks[10], ks[11], FFN_DIM, D_MODEL)
    ln1_g = jnp.ones((1, D_MODEL), jnp.float32)
    ln1_b = jnp.zeros((1, D_MODEL), jnp.float32)
    ln2_g = jnp.ones((1, D_MODEL), jnp.float32)
    ln2_b = jnp.zeros((1, D_MODEL), jnp.float32)
    return (wq, bq, wk, bk, wv, bv, wo, bo,
            ln1_g, ln1_b, w1, b1, w2, b2, ln2_g, ln2_b)


def rope_tables(seq_len, head_dim):
    inv_freq = 1.0 / (10000.0 ** (jnp.arange(0, head_dim, 2, dtype=jnp.float32) / head_dim))
    pos = jnp.arange(seq_len, dtype=jnp.float32)
    angles = pos[:, None] * inv_freq[None, :]                   # (S, head_dim/2)
    cos = jnp.concatenate([jnp.cos(angles), jnp.cos(angles)], axis=-1)
    sin = jnp.concatenate([jnp.sin(angles), jnp.sin(angles)], axis=-1)
    return cos, sin


# ------------------------- pure-JAX reference (matched precision) -------------------------
# Same bf16-MXU-input / f32-accumulation precision as the kernel (per the review, the
# reference is re-baselined to match the kernel's matmul precision).

def _mm_ref(a, b):
    return jnp.dot(a.astype(jnp.bfloat16), b.astype(jnp.bfloat16),
                   preferred_element_type=jnp.float32)


def reference_layer(x, params, cos, sin, mask):
    (wq, bq, wk, bk, wv, bv, wo, bo,
     ln1_g, ln1_b, w1, b1, w2, b2, ln2_g, ln2_b) = params
    half = HEAD_DIM // 2

    def rope(t):
        t1, t2 = t[:, :half], t[:, half:]
        return t * cos + jnp.concatenate([-t2, t1], axis=-1) * sin

    def ln(h, g, b):
        m = jnp.mean(h, -1, keepdims=True)
        v = jnp.mean((h - m) ** 2, -1, keepdims=True)
        return (h - m) * jax.lax.rsqrt(v + EPS) * g + b

    def single(xb):
        q = _mm_ref(xb, wq) + bq
        k = _mm_ref(xb, wk) + bk
        v = _mm_ref(xb, wv) + bv
        outs = []
        for h in range(N_HEADS):
            sl = slice(h * HEAD_DIM, (h + 1) * HEAD_DIM)
            qh, kh, vh = rope(q[:, sl]), rope(k[:, sl]), v[:, sl]
            s = _mm_ref(qh, kh.T) * _SCALE
            if mask is not None:
                s = s + mask
            p = jax.nn.softmax(s, axis=-1)
            outs.append(_mm_ref(p, vh))
        attn = _mm_ref(jnp.concatenate(outs, axis=-1), wo) + bo
        h1 = ln(xb + attn, ln1_g, ln1_b)
        ff = _mm_ref(jnp.maximum(_mm_ref(h1, w1) + b1, 0.0), w2) + b2
        return ln(h1 + ff, ln2_g, ln2_b)

    return jax.vmap(single)(x)


def reference_decoder(input_ids, emb_table, layers_params, cos, sin, mask=None):
    x = emb_table[input_ids]
    for params in layers_params:
        x = reference_layer(x, params, cos, sin, mask)
    return x


# ------------------------------------ main ------------------------------------

if __name__ == "__main__":
    key = jax.random.PRNGKey(0)
    k_ids, k_emb, k_layers = jax.random.split(key, 3)
    B, S = 2, 8

    input_ids = jax.random.randint(k_ids, (B, S), 0, VOCAB_SIZE, dtype=jnp.int32)
    emb_table = jax.random.normal(k_emb, (VOCAB_SIZE, D_MODEL), jnp.float32)
    layers_params = [init_layer_params(k) for k in jax.random.split(k_layers, NUM_LAYERS)]
    cos, sin = rope_tables(S, HEAD_DIM)

    # tolerance re-baselined for bf16 MXU inputs + EUP reciprocal (vs exact softmax divide)
    ATOL = RTOL = 3e-2

    # attention_mask=None path (mask add and mask DMA skipped entirely)
    shared, weights, _ = prepare_decoder(layers_params, cos, sin, attn_mask=None)
    out = roformer_decoder(input_ids, emb_table, shared, weights, amask=None)
    jax.block_until_ready(out)
    assert out.shape == (B, S, D_MODEL)
    ref = reference_decoder(input_ids, emb_table, layers_params, cos, sin, None)
    err = float(jnp.max(jnp.abs(out - ref)))
    assert jnp.allclose(out, ref, atol=ATOL, rtol=RTOL), f"no-mask max abs err = {err}"

    # additive (causal) attention-mask path
    causal = jnp.where(jnp.tril(jnp.ones((S, S), dtype=bool)), 0.0, -1e9).astype(jnp.float32)
    shared_m, weights_m, amask = prepare_decoder(layers_params, cos, sin, attn_mask=causal)
    out_m = roformer_decoder(input_ids, emb_table, shared_m, weights_m, amask=amask)
    jax.block_until_ready(out_m)
    ref_m = reference_decoder(input_ids, emb_table, layers_params, cos, sin, causal)
    err_m = float(jnp.max(jnp.abs(out_m - ref_m)))
    assert jnp.allclose(out_m, ref_m, atol=ATOL, rtol=RTOL), f"masked max abs err = {err_m}"

    print("KERNEL_OK")
</pallas_src>

<mosaic_0001>
module attributes {stable_mosaic.version = 11 : i64} {
  func.func @kernel(%arg0: i32, %arg1: i32, %arg2: memref<8x32xf32, #tpu.memory_space<vmem>>, %arg3: memref<8x32xf32, #tpu.memory_space<vmem>>, %arg4: memref<8x32xf32, #tpu.memory_space<vmem>>, %arg5: memref<32x32xf32, #tpu.memory_space<vmem>>, %arg6: memref<32x32xbf16, #tpu.memory_space<vmem>>, %arg7: memref<1x32x160xbf16, #tpu.memory_space<vmem>>, %arg8: memref<1x1x160xf32, #tpu.memory_space<vmem>>, %arg9: memref<1x32x32xbf16, #tpu.memory_space<vmem>>, %arg10: memref<1x1x32xf32, #tpu.memory_space<vmem>>, %arg11: memref<1x1x32xf32, #tpu.memory_space<vmem>>, %arg12: memref<1x1x32xf32, #tpu.memory_space<vmem>>, %arg13: memref<1x32x64xbf16, #tpu.memory_space<vmem>>, %arg14: memref<1x1x64xf32, #tpu.memory_space<vmem>>, %arg15: memref<1x64x32xbf16, #tpu.memory_space<vmem>>, %arg16: memref<1x1x32xf32, #tpu.memory_space<vmem>>, %arg17: memref<1x1x32xf32, #tpu.memory_space<vmem>>, %arg18: memref<1x1x32xf32, #tpu.memory_space<vmem>>, %arg19: memref<8x32xf32, #tpu.memory_space<vmem>>, %arg20: memref<8x32xf32, #tpu.memory_space<vmem>>) attributes {dimension_semantics = [#tpu.dimension_semantics<parallel>, #tpu.dimension_semantics<arbitrary>], iteration_bounds = array<i64: 2, 2>, scalar_prefetch = 0 : i64, scratch_operands = 1 : i64, tpu.core_type = #tpu.core_type<tc>, window_params = [{transform_indices = @transform_0, window_bounds = array<i64: 8, 32>}, {pipeline_mode = #tpu.pipeline_mode<synchronous>, transform_indices = @transform_1, window_bounds = array<i64: 8, 32>}, {pipeline_mode = #tpu.pipeline_mode<synchronous>, transform_indices = @transform_2, window_bounds = array<i64: 8, 32>}, {pipeline_mode = #tpu.pipeline_mode<synchronous>, transform_indices = @transform_3, window_bounds = array<i64: 32, 32>}, {pipeline_mode = #tpu.pipeline_mode<synchronous>, transform_indices = @transform_4, window_bounds = array<i64: 32, 32>}, {transform_indices = @transform_5, window_bounds = array<i64: 1, 32, 160>}, {transform_indices = @transform_6, window_bounds = array<i64: 1, 1, 160>}, {transform_indices = @transform_7, window_bounds = array<i64: 1, 32, 32>}, {transform_indices = @transform_8, window_bounds = array<i64: 1, 1, 32>}, {transform_indices = @transform_9, window_bounds = array<i64: 1, 1, 32>}, {transform_indices = @transform_10, window_bounds = array<i64: 1, 1, 32>}, {transform_indices = @transform_11, window_bounds = array<i64: 1, 32, 64>}, {transform_indices = @transform_12, window_bounds = array<i64: 1, 1, 64>}, {transform_indices = @transform_13, window_bounds = array<i64: 1, 64, 32>}, {transform_indices = @transform_14, window_bounds = array<i64: 1, 1, 32>}, {transform_indices = @transform_15, window_bounds = array<i64: 1, 1, 32>}, {transform_indices = @transform_16, window_bounds = array<i64: 1, 1, 32>}, {transform_indices = @transform_17, window_bounds = array<i64: 8, 32>}]} {
    %c0_i32 = arith.constant 0 : i32
    %0 = arith.cmpi eq, %arg1, %c0_i32 : i32
    %1 = arith.extui %0 : i1 to i32
    %c0_i32_0 = arith.constant 0 : i32
    %2 = arith.cmpi ne, %1, %c0_i32_0 : i32
    scf.if %2 {
      %c0_69 = arith.constant 0 : index
      %c0_70 = arith.constant 0 : index
      %148 = vector.load %arg2[%c0_69, %c0_70] : memref<8x32xf32, #tpu.memory_space<vmem>>, vector<8x32xf32>
      %c0_71 = arith.constant 0 : index
      %c0_72 = arith.constant 0 : index
      %149 = vector.load %arg20[%c0_71, %c0_72] : memref<8x32xf32, #tpu.memory_space<vmem>>, vector<8x32xf32>
      tpu.vector_store %arg20[%c0_71, %c0_72], %148 {strides = array<i32>} : memref<8x32xf32, #tpu.memory_space<vmem>>, vector<8x32xf32>,
    } else {
    }
    %c0 = arith.constant 0 : index
    %c0_1 = arith.constant 0 : index
    %3 = vector.load %arg20[%c0, %c0_1] : memref<8x32xf32, #tpu.memory_space<vmem>>, vector<8x32xf32>
    %c0_2 = arith.constant 0 : index
    %c0_3 = arith.constant 0 : index
    %c0_4 = arith.constant 0 : index
    %4 = vector.load %arg7[%c0_2, %c0_3, %c0_4] : memref<1x32x160xbf16, #tpu.memory_space<vmem>>, vector<1x32x160xbf16>
    %5 = vector.shape_cast %4 : vector<1x32x160xbf16> to vector<32x160xbf16>
    %6 = arith.truncf %3 : vector<8x32xf32> to vector<8x32xbf16>
    %cst = arith.constant dense<0.000000e+00> : vector<8x160xf32>
    %7 = tpu.matmul %6, %5, %cst {dimension_numbers = #tpu.dot_dimension_numbers<[1], [0], [0], [1], [0, 0, 1, 1], [], []>} : vector<8x32xbf16>, vector<32x160xbf16>, vector<8x160xf32> -> vector<8x160xf32>
    %c0_5 = arith.constant 0 : index
    %c0_6 = arith.constant 0 : index
    %c0_7 = arith.constant 0 : index
    %8 = vector.load %arg8[%c0_5, %c0_6, %c0_7] : memref<1x1x160xf32, #tpu.memory_space<vmem>>, vector<1x1x160xf32>
    %9 = vector.shape_cast %8 : vector<1x1x160xf32> to vector<1x160xf32>
    %10 = vector.broadcast %9 : vector<1x160xf32> to vector<8x160xf32>
    %11 = arith.addf %7, %10 : vector<8x160xf32>
    %12 = vector.extract_strided_slice %11 {offsets = [0, 0], sizes = [8, 32], strides = [1, 1]} : vector<8x160xf32> to vector<8x32xf32>
    %13 = vector.extract_strided_slice %11 {offsets = [0, 32], sizes = [8, 32], strides = [1, 1]} : vector<8x160xf32> to vector<8x32xf32>
    %14 = vector.extract_strided_slice %11 {offsets = [0, 64], sizes = [8, 32], strides = [1, 1]} : vector<8x160xf32> to vector<8x32xf32>
    %15 = vector.extract_strided_slice %11 {offsets = [0, 96], sizes = [8, 32], strides = [1, 1]} : vector<8x160xf32> to vector<8x32xf32>
    %16 = vector.extract_strided_slice %11 {offsets = [0, 128], sizes = [8, 32], strides = [1, 1]} : vector<8x160xf32> to vector<8x32xf32>
    %c0_8 = arith.constant 0 : index
    %c0_9 = arith.constant 0 : index
    %17 = vector.load %arg3[%c0_8, %c0_9] : memref<8x32xf32, #tpu.memory_space<vmem>>, vector<8x32xf32>
    %18 = vector.shape_cast %17 : vector<8x32xf32> to vector<1x8x32xf32>
    %c0_10 = arith.constant 0 : index
    %c0_11 = arith.constant 0 : index
    %19 = vector.load %arg4[%c0_10, %c0_11] : memref<8x32xf32, #tpu.memory_space<vmem>>, vector<8x32xf32>
    %20 = vector.shape_cast %19 : vector<8x32xf32> to vector<1x8x32xf32>
    %21 = vector.shape_cast %12 : vector<8x32xf32> to vector<1x8x32xf32>
    %22 = arith.mulf %21, %18 : vector<1x8x32xf32>
    %23 = vector.shape_cast %13 : vector<8x32xf32> to vector<1x8x32xf32>
    %24 = arith.mulf %23, %20 : vector<1x8x32xf32>
    %25 = arith.addf %22, %24 : vector<1x8x32xf32>
    %26 = vector.shape_cast %14 : vector<8x32xf32> to vector<1x8x32xf32>
    %27 = arith.mulf %26, %18 : vector<1x8x32xf32>
    %28 = vector.shape_cast %15 : vector<8x32xf32> to vector<1x8x32xf32>
    %29 = arith.mulf %28, %20 : vector<1x8x32xf32>
    %30 = arith.addf %27, %29 : vector<1x8x32xf32>
    %31 = vector.shape_cast %16 : vector<8x32xf32> to vector<1x8x32xf32>
    %c0_12 = arith.constant 0 : index
    %c0_13 = arith.constant 0 : index
    %32 = vector.load %arg5[%c0_12, %c0_13] : memref<32x32xf32, #tpu.memory_space<vmem>>, vector<32x32xf32>
    %33 = tpu.concatenate %30, %30, %30, %30 in 1 : vector<1x8x32xf32>, vector<1x8x32xf32>, vector<1x8x32xf32>, vector<1x8x32xf32> -> vector<1x32x32xf32>
    %34 = vector.shape_cast %32 : vector<32x32xf32> to vector<1x32x32xf32>
    %35 = arith.mulf %33, %34 : vector<1x32x32xf32>
    %36 = tpu.concatenate %31, %31, %31, %31 in 1 : vector<1x8x32xf32>, vector<1x8x32xf32>, vector<1x8x32xf32>, vector<1x8x32xf32> -> vector<1x32x32xf32>
    %37 = vector.shape_cast %32 : vector<32x32xf32> to vector<1x32x32xf32>
    %38 = arith.mulf %36, %37 : vector<1x32x32xf32>
    %39 = arith.truncf %25 : vector<1x8x32xf32> to vector<1x8x32xbf16>
    %40 = arith.truncf %35 : vector<1x32x32xf32> to vector<1x32x32xbf16>
    "tpu.trace_start"() <{level = 10 : i32, message = "bqd,bnd->bqn"}> : () -> ()
    %cst_14 = arith.constant dense<0.000000e+00> : vector<1x8x32xf32>
    %41 = tpu.matmul %39, %40, %cst_14 {dimension_numbers = #tpu.dot_dimension_numbers<[2], [2], [1], [1], [0, 0, 0, 1, 1, 1], [0], [0]>} : vector<1x8x32xbf16>, vector<1x32x32xbf16>, vector<1x8x32xf32> -> vector<1x8x32xf32>
    "tpu.trace_stop"() : () -> ()
    %cst_15 = arith.constant 0.353553385 : f32
    %42 = vector.broadcast %cst_15 : f32 to vector<1x8x32xf32>
    %43 = arith.mulf %41, %42 : vector<1x8x32xf32>
    %cst_16 = arith.constant dense<0xFF800000> : vector<1x8xf32>
    %44 = vector.multi_reduction <maximumf>, %43, %cst_16 [2] : vector<1x8x32xf32> to vector<1x8xf32>
    %45 = vector.shape_cast %44 : vector<1x8xf32> to vector<1x8x1xf32>
    %46 = vector.broadcast %45 : vector<1x8x1xf32> to vector<1x8x32xf32>
    %47 = arith.subf %43, %46 : vector<1x8x32xf32>
    %48 = math.exp %47 : vector<1x8x32xf32>
    %49 = vector.shape_cast %48 : vector<1x8x32xf32> to vector<8x32xf32>
    %c0_17 = arith.constant 0 : index
    %c0_18 = arith.constant 0 : index
    %50 = vector.load %arg6[%c0_17, %c0_18] : memref<32x32xbf16, #tpu.memory_space<vmem>>, vector<32x32xbf16>
    %51 = arith.truncf %49 : vector<8x32xf32> to vector<8x32xbf16>
    %cst_19 = arith.constant dense<0.000000e+00> : vector<8x32xf32>
    %52 = tpu.matmul %51, %50, %cst_19 {dimension_numbers = #tpu.dot_dimension_numbers<[1], [0], [0], [1], [0, 0, 1, 1], [], []>} : vector<8x32xbf16>, vector<32x32xbf16>, vector<8x32xf32> -> vector<8x32xf32>
    %53 = tpu.reciprocal %52 {approx = true} : vector<8x32xf32> -> vector<8x32xf32>
    %54 = arith.mulf %52, %53 : vector<8x32xf32>
    %cst_20 = arith.constant 2.000000e+00 : f32
    %55 = vector.broadcast %cst_20 : f32 to vector<8x32xf32>
    %56 = arith.subf %55, %54 : vector<8x32xf32>
    %57 = arith.mulf %53, %56 : vector<8x32xf32>
    %58 = arith.mulf %49, %57 : vector<8x32xf32>
    %59 = vector.shape_cast %58 : vector<8x32xf32> to vector<1x8x32xf32>
    %60 = arith.truncf %59 : vector<1x8x32xf32> to vector<1x8x32xbf16>
    %61 = arith.truncf %38 : vector<1x32x32xf32> to vector<1x32x32xbf16>
    "tpu.trace_start"() <{level = 10 : i32, message = "bqn,bnd->bqd"}> : () -> ()
    %cst_21 = arith.constant dense<0.000000e+00> : vector<1x8x32xf32>
    %62 = tpu.matmul %60, %61, %cst_21 {dimension_numbers = #tpu.dot_dimension_numbers<[2], [1], [1], [2], [0, 0, 0, 1, 1, 2], [0], [0]>} : vector<1x8x32xbf16>, vector<1x32x32xbf16>, vector<1x8x32xf32> -> vector<1x8x32xf32>
    "tpu.trace_stop"() : () -> ()
    %63 = vector.shape_cast %62 : vector<1x8x32xf32> to vector<8x32xf32>
    %c0_22 = arith.constant 0 : index
    %c0_23 = arith.constant 0 : index
    %c0_24 = arith.constant 0 : index
    %64 = vector.load %arg9[%c0_22, %c0_23, %c0_24] : memref<1x32x32xbf16, #tpu.memory_space<vmem>>, vector<1x32x32xbf16>
    %65 = vector.shape_cast %64 : vector<1x32x32xbf16> to vector<32x32xbf16>
    %66 = arith.truncf %63 : vector<8x32xf32> to vector<8x32xbf16>
    %cst_25 = arith.constant dense<0.000000e+00> : vector<8x32xf32>
    %67 = tpu.matmul %66, %65, %cst_25 {dimension_numbers = #tpu.dot_dimension_numbers<[1], [0], [0], [1], [0, 0, 1, 1], [], []>} : vector<8x32xbf16>, vector<32x32xbf16>, vector<8x32xf32> -> vector<8x32xf32>
    %c0_26 = arith.constant 0 : index
    %c0_27 = arith.constant 0 : index
    %c0_28 = arith.constant 0 : index
    %68 = vector.load %arg10[%c0_26, %c0_27, %c0_28] : memref<1x1x32xf32, #tpu.memory_space<vmem>>, vector<1x1x32xf32>
    %69 = vector.shape_cast %68 : vector<1x1x32xf32> to vector<1x32xf32>
    %70 = vector.broadcast %69 : vector<1x32xf32> to vector<8x32xf32>
    %71 = arith.addf %67, %70 : vector<8x32xf32>
    %72 = arith.addf %3, %71 : vector<8x32xf32>
    %c0_29 = arith.constant 0 : index
    %c0_30 = arith.constant 0 : index
    %c0_31 = arith.constant 0 : index
    %73 = vector.load %arg11[%c0_29, %c0_30, %c0_31] : memref<1x1x32xf32, #tpu.memory_space<vmem>>, vector<1x1x32xf32>
    %74 = vector.shape_cast %73 : vector<1x1x32xf32> to vector<1x32xf32>
    %c0_32 = arith.constant 0 : index
    %c0_33 = arith.constant 0 : index
    %c0_34 = arith.constant 0 : index
    %75 = vector.load %arg12[%c0_32, %c0_33, %c0_34] : memref<1x1x32xf32, #tpu.memory_space<vmem>>, vector<1x1x32xf32>
    %76 = vector.shape_cast %75 : vector<1x1x32xf32> to vector<1x32xf32>
    %cst_35 = arith.constant dense<0.000000e+00> : vector<8xf32>
    %77 = vector.multi_reduction <add>, %72, %cst_35 [1] : vector<8x32xf32> to vector<8xf32>
    %78 = vector.shape_cast %77 : vector<8xf32> to vector<8x1xf32>
    %cst_36 = arith.constant 3.200000e+01 : f32
    %79 = vector.broadcast %cst_36 : f32 to vector<8x1xf32>
    %80 = arith.divf %78, %79 : vector<8x1xf32>
    %81 = vector.broadcast %80 : vector<8x1xf32> to vector<8x32xf32>
    %82 = arith.subf %72, %81 : vector<8x32xf32>
    %83 = arith.mulf %82, %82 : vector<8x32xf32>
    %cst_37 = arith.constant dense<0.000000e+00> : vector<8xf32>
    %84 = vector.multi_reduction <add>, %83, %cst_37 [1] : vector<8x32xf32> to vector<8xf32>
    %85 = vector.shape_cast %84 : vector<8xf32> to vector<8x1xf32>
    %cst_38 = arith.constant 3.200000e+01 : f32
    %86 = vector.broadcast %cst_38 : f32 to vector<8x1xf32>
    %87 = arith.divf %85, %86 : vector<8x1xf32>
    %88 = vector.broadcast %80 : vector<8x1xf32> to vector<8x32xf32>
    %89 = arith.subf %72, %88 : vector<8x32xf32>
    %cst_39 = arith.constant 9.99999974E-6 : f32
    %90 = vector.broadcast %cst_39 : f32 to vector<8x1xf32>
    %91 = arith.addf %87, %90 : vector<8x1xf32>
    %92 = math.rsqrt %91 : vector<8x1xf32>
    %93 = vector.broadcast %92 : vector<8x1xf32> to vector<8x32xf32>
    %94 = arith.mulf %89, %93 : vector<8x32xf32>
    %95 = vector.broadcast %74 : vector<1x32xf32> to vector<8x32xf32>
    %96 = arith.mulf %94, %95 : vector<8x32xf32>
    %97 = vector.broadcast %76 : vector<1x32xf32> to vector<8x32xf32>
    %98 = arith.addf %96, %97 : vector<8x32xf32>
    %c0_40 = arith.constant 0 : index
    %c0_41 = arith.constant 0 : index
    %c0_42 = arith.constant 0 : index
    %99 = vector.load %arg13[%c0_40, %c0_41, %c0_42] : memref<1x32x64xbf16, #tpu.memory_space<vmem>>, vector<1x32x64xbf16>
    %100 = vector.shape_cast %99 : vector<1x32x64xbf16> to vector<32x64xbf16>
    %101 = arith.truncf %98 : vector<8x32xf32> to vector<8x32xbf16>
    %cst_43 = arith.constant dense<0.000000e+00> : vector<8x64xf32>
    %102 = tpu.matmul %101, %100, %cst_43 {dimension_numbers = #tpu.dot_dimension_numbers<[1], [0], [0], [1], [0, 0, 1, 1], [], []>} : vector<8x32xbf16>, vector<32x64xbf16>, vector<8x64xf32> -> vector<8x64xf32>
    %c0_44 = arith.constant 0 : index
    %c0_45 = arith.constant 0 : index
    %c0_46 = arith.constant 0 : index
    %103 = vector.load %arg14[%c0_44, %c0_45, %c0_46] : memref<1x1x64xf32, #tpu.memory_space<vmem>>, vector<1x1x64xf32>
    %104 = vector.shape_cast %103 : vector<1x1x64xf32> to vector<1x64xf32>
    %105 = vector.broadcast %104 : vector<1x64xf32> to vector<8x64xf32>
    %106 = arith.addf %102, %105 : vector<8x64xf32>
    %cst_47 = arith.constant 0.000000e+00 : f32
    %107 = vector.broadcast %cst_47 : f32 to vector<8x64xf32>
    %108 = arith.maximumf %106, %107 : vector<8x64xf32>
    %c0_48 = arith.constant 0 : index
    %c0_49 = arith.constant 0 : index
    %c0_50 = arith.constant 0 : index
    %109 = vector.load %arg15[%c0_48, %c0_49, %c0_50] : memref<1x64x32xbf16, #tpu.memory_space<vmem>>, vector<1x64x32xbf16>
    %110 = vector.shape_cast %109 : vector<1x64x32xbf16> to vector<64x32xbf16>
    %111 = arith.truncf %108 : vector<8x64xf32> to vector<8x64xbf16>
    %cst_51 = arith.constant dense<0.000000e+00> : vector<8x32xf32>
    %112 = tpu.matmul %111, %110, %cst_51 {dimension_numbers = #tpu.dot_dimension_numbers<[1], [0], [0], [1], [0, 0, 1, 1], [], []>} : vector<8x64xbf16>, vector<64x32xbf16>, vector<8x32xf32> -> vector<8x32xf32>
    %c0_52 = arith.constant 0 : index
    %c0_53 = arith.constant 0 : index
    %c0_54 = arith.constant 0 : index
    %113 = vector.load %arg16[%c0_52, %c0_53, %c0_54] : memref<1x1x32xf32, #tpu.memory_space<vmem>>, vector<1x1x32xf32>
    %114 = vector.shape_cast %113 : vector<1x1x32xf32> to vector<1x32xf32>
    %115 = vector.broadcast %114 : vector<1x32xf32> to vector<8x32xf32>
    %116 = arith.addf %112, %115 : vector<8x32xf32>
    %117 = arith.addf %98, %116 : vector<8x32xf32>
    %c0_55 = arith.constant 0 : index
    %c0_56 = arith.constant 0 : index
    %c0_57 = arith.constant 0 : index
    %118 = vector.load %arg17[%c0_55, %c0_56, %c0_57] : memref<1x1x32xf32, #tpu.memory_space<vmem>>, vector<1x1x32xf32>
    %119 = vector.shape_cast %118 : vector<1x1x32xf32> to vector<1x32xf32>
    %c0_58 = arith.constant 0 : index
    %c0_59 = arith.constant 0 : index
    %c0_60 = arith.constant 0 : index
    %120 = vector.load %arg18[%c0_58, %c0_59, %c0_60] : memref<1x1x32xf32, #tpu.memory_space<vmem>>, vector<1x1x32xf32>
    %121 = vector.shape_cast %120 : vector<1x1x32xf32> to vector<1x32xf32>
    %cst_61 = arith.constant dense<0.000000e+00> : vector<8xf32>
    %122 = vector.multi_reduction <add>, %117, %cst_61 [1] : vector<8x32xf32> to vector<8xf32>
    %123 = vector.shape_cast %122 : vector<8xf32> to vector<8x1xf32>
    %cst_62 = arith.constant 3.200000e+01 : f32
    %124 = vector.broadcast %cst_62 : f32 to vector<8x1xf32>
    %125 = arith.divf %123, %124 : vector<8x1xf32>
    %126 = vector.broadcast %125 : vector<8x1xf32> to vector<8x32xf32>
    %127 = arith.subf %117, %126 : vector<8x32xf32>
    %128 = arith.mulf %127, %127 : vector<8x32xf32>
    %cst_63 = arith.constant dense<0.000000e+00> : vector<8xf32>
    %129 = vector.multi_reduction <add>, %128, %cst_63 [1] : vector<8x32xf32> to vector<8xf32>
    %130 = vector.shape_cast %129 : vector<8xf32> to vector<8x1xf32>
    %cst_64 = arith.constant 3.200000e+01 : f32
    %131 = vector.broadcast %cst_64 : f32 to vector<8x1xf32>
    %132 = arith.divf %130, %131 : vector<8x1xf32>
    %133 = vector.broadcast %125 : vector<8x1xf32> to vector<8x32xf32>
    %134 = arith.subf %117, %133 : vector<8x32xf32>
    %cst_65 = arith.constant 9.99999974E-6 : f32
    %135 = vector.broadcast %cst_65 : f32 to vector<8x1xf32>
    %136 = arith.addf %132, %135 : vector<8x1xf32>
    %137 = math.rsqrt %136 : vector<8x1xf32>
    %138 = vector.broadcast %137 : vector<8x1xf32> to vector<8x32xf32>
    %139 = arith.mulf %134, %138 : vector<8x32xf32>
    %140 = vector.broadcast %119 : vector<1x32xf32> to vector<8x32xf32>
    %141 = arith.mulf %139, %140 : vector<8x32xf32>
    %142 = vector.broadcast %121 : vector<1x32xf32> to vector<8x32xf32>
    %143 = arith.addf %141, %142 : vector<8x32xf32>
    %c0_66 = arith.constant 0 : index
    %c0_67 = arith.constant 0 : index
    %144 = vector.load %arg20[%c0_66, %c0_67] : memref<8x32xf32, #tpu.memory_space<vmem>>, vector<8x32xf32>
    tpu.vector_store %arg20[%c0_66, %c0_67], %143 {strides = array<i32>} : memref<8x32xf32, #tpu.memory_space<vmem>>, vector<8x32xf32>,
    %c1_i32 = arith.constant 1 : i32
    %145 = arith.cmpi eq, %arg1, %c1_i32 : i32
    %146 = arith.extui %145 : i1 to i32
    %c0_i32_68 = arith.constant 0 : i32
    %147 = arith.cmpi ne, %146, %c0_i32_68 : i32
    scf.if %147 {
      %c0_69 = arith.constant 0 : index
      %c0_70 = arith.constant 0 : index
      %148 = vector.load %arg19[%c0_69, %c0_70] : memref<8x32xf32, #tpu.memory_space<vmem>>, vector<8x32xf32>
      tpu.vector_store %arg19[%c0_69, %c0_70], %143 {strides = array<i32>} : memref<8x32xf32, #tpu.memory_space<vmem>>, vector<8x32xf32>,
    } else {
    }
    return
  }
  func.func @transform_0(%arg0: i32, %arg1: i32) -> (i32, i32) {
    %c0_i32 = arith.constant 0 : i32
    %c0_i32_0 = arith.constant 0 : i32
    return %arg0, %c0_i32 : i32, i32
  }
  func.func @transform_1(%arg0: i32, %arg1: i32) -> (i32, i32) {
    %c0_i32 = arith.constant 0 : i32
    %c0_i32_0 = arith.constant 0 : i32
    %c0_i32_1 = arith.constant 0 : i32
    return %c0_i32, %c0_i32_0 : i32, i32
  }
  func.func @transform_2(%arg0: i32, %arg1: i32) -> (i32, i32) {
    %c0_i32 = arith.constant 0 : i32
    %c0_i32_0 = arith.constant 0 : i32
    %c0_i32_1 = arith.constant 0 : i32
    return %c0_i32, %c0_i32_0 : i32, i32
  }
  func.func @transform_3(%arg0: i32, %arg1: i32) -> (i32, i32) {
    %c0_i32 = arith.constant 0 : i32
    %c0_i32_0 = arith.constant 0 : i32
    %c0_i32_1 = arith.constant 0 : i32
    return %c0_i32, %c0_i32_0 : i32, i32
  }
  func.func @transform_4(%arg0: i32, %arg1: i32) -> (i32, i32) {
    %c0_i32 = arith.constant 0 : i32
    %c0_i32_0 = arith.constant 0 : i32
    %c0_i32_1 = arith.constant 0 : i32
    return %c0_i32, %c0_i32_0 : i32, i32
  }
  func.func @transform_5(%arg0: i32, %arg1: i32) -> (i32, i32, i32) {
    %c0_i32 = arith.constant 0 : i32
    %c0_i32_0 = arith.constant 0 : i32
    %c0_i32_1 = arith.constant 0 : i32
    return %arg1, %c0_i32, %c0_i32_0 : i32, i32, i32
  }
  func.func @transform_6(%arg0: i32, %arg1: i32) -> (i32, i32, i32) {
    %c0_i32 = arith.constant 0 : i32
    %c0_i32_0 = arith.constant 0 : i32
    %c0_i32_1 = arith.constant 0 : i32
    return %arg1, %c0_i32, %c0_i32_0 : i32, i32, i32
  }
  func.func @transform_7(%arg0: i32, %arg1: i32) -> (i32, i32, i32) {
    %c0_i32 = arith.constant 0 : i32
    %c0_i32_0 = arith.constant 0 : i32
    %c0_i32_1 = arith.constant 0 : i32
    return %arg1, %c0_i32, %c0_i32_0 : i32, i32, i32
  }
  func.func @transform_8(%arg0: i32, %arg1: i32) -> (i32, i32, i32) {
    %c0_i32 = arith.constant 0 : i32
    %c0_i32_0 = arith.constant 0 : i32
    %c0_i32_1 = arith.constant 0 : i32
    return %arg1, %c0_i32, %c0_i32_0 : i32, i32, i32
  }
  func.func @transform_9(%arg0: i32, %arg1: i32) -> (i32, i32, i32) {
    %c0_i32 = arith.constant 0 : i32
    %c0_i32_0 = arith.constant 0 : i32
    %c0_i32_1 = arith.constant 0 : i32
    return %arg1, %c0_i32, %c0_i32_0 : i32, i32, i32
  }
  func.func @transform_10(%arg0: i32, %arg1: i32) -> (i32, i32, i32) {
    %c0_i32 = arith.constant 0 : i32
    %c0_i32_0 = arith.constant 0 : i32
    %c0_i32_1 = arith.constant 0 : i32
    return %arg1, %c0_i32, %c0_i32_0 : i32, i32, i32
  }
  func.func @transform_11(%arg0: i32, %arg1: i32) -> (i32, i32, i32) {
    %c0_i32 = arith.constant 0 : i32
    %c0_i32_0 = arith.constant 0 : i32
    %c0_i32_1 = arith.constant 0 : i32
    return %arg1, %c0_i32, %c0_i32_0 : i32, i32, i32
  }
  func.func @transform_12(%arg0: i32, %arg1: i32) -> (i32, i32, i32) {
    %c0_i32 = arith.constant 0 : i32
    %c0_i32_0 = arith.constant 0 : i32
    %c0_i32_1 = arith.constant 0 : i32
    return %arg1, %c0_i32, %c0_i32_0 : i32, i32, i32
  }
  func.func @transform_13(%arg0: i32, %arg1: i32) -> (i32, i32, i32) {
    %c0_i32 = arith.constant 0 : i32
    %c0_i32_0 = arith.constant 0 : i32
    %c0_i32_1 = arith.constant 0 : i32
    return %arg1, %c0_i32, %c0_i32_0 : i32, i32, i32
  }
  func.func @transform_14(%arg0: i32, %arg1: i32) -> (i32, i32, i32) {
    %c0_i32 = arith.constant 0 : i32
    %c0_i32_0 = arith.constant 0 : i32
    %c0_i32_1 = arith.constant 0 : i32
    return %arg1, %c0_i32, %c0_i32_0 : i32, i32, i32
  }
  func.func @transform_15(%arg0: i32, %arg1: i32) -> (i32, i32, i32) {
    %c0_i32 = arith.constant 0 : i32
    %c0_i32_0 = arith.constant 0 : i32
    %c0_i32_1 = arith.constant 0 : i32
    return %arg1, %c0_i32, %c0_i32_0 : i32, i32, i32
  }
  func.func @transform_16(%arg0: i32, %arg1: i32) -> (i32, i32, i32) {
    %c0_i32 = arith.constant 0 : i32
    %c0_i32_0 = arith.constant 0 : i32
    %c0_i32_1 = arith.constant 0 : i32
    return %arg1, %c0_i32, %c0_i32_0 : i32, i32, i32
  }
  func.func @transform_17(%arg0: i32, %arg1: i32) -> (i32, i32) {
    %c0_i32 = arith.constant 0 : i32
    %c0_i32_0 = arith.constant 0 : i32
    return %arg0, %c0_i32 : i32, i32
  }
}

</mosaic_0001>

<llo_original>
// kernel: tpu_custom_call.1
$region0: #{tpu_custom_call.1}
  #allocation0 [shape = 'u32[]', space=smem, size = 0x4, offset = 0x4, fixed_abs, tag = 'smem constant byte address 0x4 - core index']
  #allocation1 [shape = 'u32[144,128]{1,0:T(1,128)}', space=vmem, size = 0x12000, scoped, tag = 'internal scratch']
  #allocation2 [shape = 'f32[8,32]{1,0:T(8,128)}', space=vmem, size = 0x1000, scoped, tag = 'scratch operand']
  %s0 = inlined_call_operand.vmem [shape: f32[16,32], index: 0, kind: input, shape index: {}]
  %s1 = inlined_call_operand.hbm [shape: f32[8,32], index: 1, kind: input, shape index: {}]
  %s2 = inlined_call_operand.hbm [shape: f32[8,32], index: 2, kind: input, shape index: {}]
  %s3 = inlined_call_operand.vmem [shape: f32[32,32], index: 3, kind: input, shape index: {}]
  %s4 = inlined_call_operand.hbm [shape: bf16[32,32], index: 4, kind: input, shape index: {}]
  %s5 = inlined_call_operand.vmem [shape: bf16[2,32,160], index: 5, kind: input, shape index: {}]
  %s6 = inlined_call_operand.hbm [shape: f32[2,1,160], index: 6, kind: input, shape index: {}]
  %s7 = inlined_call_operand.hbm [shape: bf16[2,32,32], index: 7, kind: input, shape index: {}]
  %s8 = inlined_call_operand.hbm [shape: f32[2,1,32], index: 8, kind: input, shape index: {}]
  %s9 = inlined_call_operand.hbm [shape: f32[2,1,32], index: 9, kind: input, shape index: {}]
  %s10 = inlined_call_operand.hbm [shape: f32[2,1,32], index: 10, kind: input, shape index: {}]
  %s11 = inlined_call_operand.hbm [shape: bf16[2,32,64], index: 11, kind: input, shape index: {}]
  %s12 = inlined_call_operand.hbm [shape: f32[2,1,64], index: 12, kind: input, shape index: {}]
  %s13 = inlined_call_operand.vmem [shape: bf16[2,64,32], index: 13, kind: input, shape index: {}]
  %s14 = inlined_call_operand.vmem [shape: f32[2,1,32], index: 14, kind: input, shape index: {}]
  %s15 = inlined_call_operand.vmem [shape: f32[2,1,32], index: 15, kind: input, shape index: {}]
  %s16 = inlined_call_operand.vmem [shape: f32[2,1,32], index: 16, kind: input, shape index: {}]
  %s17 = inlined_call_operand.hbm [shape: f32[16,32], index: 17, kind: output, shape index: {}]
  %s18 = sld [smem:[#allocation0]]
  $region149: #{tpu_custom_call.1} parent=0
    _
  %s20 = ssub.s32 1, %s18
  %s21 = scalar_select 0, %s20, %s18
  $region1: #{tpu_custom_call.1} parent=0
    #allocation3 [shape = 'u8[4096]{0}', space=vmem, size = 0x1000, scoped, tag = 'input window, operand 1, single buffered']
    #allocation4 [shape = 's32[2]{0}', space=sflag, size = 0x8, scoped, tag = 'scoped memory for tpu_custom_call.1']
    #allocation5 [shape = 's32[2]{0}', space=sflag, size = 0x8, scoped, tag = 'scoped memory for tpu_custom_call.1']
    #allocation6 [shape = 'u8[4096]{0}', space=vmem, size = 0x1000, scoped, tag = 'input window, operand 2, single buffered']
    #allocation7 [shape = 's32[1]{0}', space=sflag, size = 0x4, scoped, tag = 'scoped memory for tpu_custom_call.1']
    #allocation8 [shape = 'u8[8192]{0}', space=vmem, size = 0x2000, scoped, tag = 'input window, operand 4, single buffered']
    #allocation9 [shape = 'u8[2048]{0}', space=vmem, size = 0x800, scoped, tag = 'input window, operand 6']
    #allocation10 [shape = 's32[2]{0}', space=sflag, size = 0x8, scoped, tag = 'scoped memory for tpu_custom_call.1']
    #allocation11 [shape = 'u8[16384]{0}', space=vmem, size = 0x4000, scoped, tag = 'input window, operand 7']
    #allocation12 [shape = 'u8[1024]{0}', space=vmem, size = 0x400, scoped, tag = 'input window, operand 8']
    #allocation13 [shape = 's32[2]{0}', space=sflag, size = 0x8, scoped, tag = 'scoped memory for tpu_custom_call.1']
    #allocation14 [shape = 'u8[1024]{0}', space=vmem, size = 0x400, scoped, tag = 'input window, operand 9']
    #allocation15 [shape = 'u8[1024]{0}', space=vmem, size = 0x400, scoped, tag = 'input window, operand 10']
    #allocation16 [shape = 's32[2]{0}', space=sflag, size = 0x8, scoped, tag = 'scoped memory for tpu_custom_call.1']
    #allocation17 [shape = 'u8[16384]{0}', space=vmem, size = 0x4000, scoped, tag = 'input window, operand 11']
    #allocation18 [shape = 'u8[1024]{0}', space=vmem, size = 0x400, scoped, tag = 'input window, operand 12']
    #allocation19 [shape = 's32[2]{0}', space=sflag, size = 0x8, scoped, tag = 'scoped memory for tpu_custom_call.1']
    #allocation20 [shape = 'u8[8192]{0}', space=vmem, size = 0x2000, scoped, tag = 'output window, operand 0']
    %22 = vsyncpa [#allocation4], 0
    %23 = vsyncpa [#allocation7], 0
    %24 = vsyncpa [#allocation10], 0
    %s25 = scalar_lea.sflag [#allocation10], 1
    %26 = vsyncpa %s25, 0
    %27 = vsyncpa [#allocation13], 0
    %s28 = scalar_lea.sflag [#allocation13], 1
    %29 = vsyncpa %s28, 0
    %30 = vsyncpa [#allocation16], 0
    %s31 = scalar_lea.sflag [#allocation16], 1
    %32 = vsyncpa %s31, 0
    %33 = vsyncpa [#allocation19], 0
    %s34 = scalar_lea.sflag [#allocation19], 1
    %35 = vsyncpa %s34, 0
    %36 = vsyncpa [#allocation5], 0
    %s37 = scalar_lea.sflag [#allocation5], 1
    %38 = vsyncpa %s37, 0
    loop: start=0, step=1, limit=6
    $region2: #{tpu_custom_call.1} parent=1 // loop_pre_header
      _
    $region3: #{tpu_custom_call.1} parent=1 // loop_header
      %s40 = sphi 0, %s44
      %p41 = scmp.ge.s32.totalorder %s40, 6
      %s47 = sphi 0, %s59
      %s48 = sphi 0, %s55
      %s49 = sphi 0, %s47
      %s50 = sphi 0, %s48
      %s51 = sphi 0, %s49
      %s52 = sphi 0, %s50
      %s62 = sphi 0, %s64
      %s65 = sphi 0, %s62
      %s66 = sphi 0, %s65
      %s82 = sphi 0, %s66
      %s86 = sphi 0, %s86
      %s88 = sphi 0, %s86
      %s89 = sphi 0, %s88
      %s103 = sphi 0, %s89
      %s107 = sphi 0, %s107
      %s109 = sphi 0, %s107
      %s110 = sphi 0, %s109
      %s124 = sphi 0, %s110
      %s128 = sphi 0, %s128
      %s130 = sphi 0, %s128
      %s131 = sphi 0, %s130
      %s145 = sphi 0, %s131
      %s149 = sphi 0, %s149
      %s151 = sphi 0, %s149
      %s152 = sphi 0, %s151
      %s166 = sphi 0, %s152
      %s172 = sphi 0, %s174
      %s175 = sphi 0, %s172
      %s176 = sphi 0, %s175
      %s192 = sphi 0, %s176
      %s198 = sphi 0, %s200
      %s201 = sphi 0, %s198
      %s202 = sphi 0, %s201
      %s218 = sphi 0, %s202
      %s224 = sphi 0, %s226
      %s227 = sphi 0, %s224
      %s228 = sphi 0, %s227
      %s244 = sphi 0, %s228
      %s250 = sphi 0, %s252
      %s253 = sphi 0, %s250
      %s254 = sphi 0, %s253
      %s270 = sphi 0, %s254
      %s276 = sphi 0, %s278
      %s279 = sphi 0, %s276
      %s280 = sphi 0, %s279
      %s296 = sphi 0, %s280
      %s302 = sphi 0, %s304
      %s305 = sphi 0, %s302
      %s306 = sphi 0, %s305
      %s322 = sphi 0, %s306
      %s328 = sphi 0, %s330
      %s331 = sphi 0, %s328
      %s332 = sphi 0, %s331
      %s348 = sphi 0, %s332
      %s354 = sphi 0, %s356
      %s357 = sphi 0, %s354
      %s358 = sphi 0, %s357
      %s374 = sphi 0, %s358
      %s380 = sphi 0, %s382
      %s383 = sphi 0, %s380
      %s384 = sphi 0, %s383
      %s400 = sphi 0, %s384
      %s406 = sphi 0, %s408
      %s409 = sphi 0, %s406
      %s410 = sphi 0, %s409
      %s426 = sphi 0, %s410
      %s432 = sphi 0, %s434
      %s435 = sphi 0, %s432
      %s436 = sphi 0, %s435
      %s452 = sphi 0, %s436
      %s458 = sphi 0, %s460
      %s461 = sphi 0, %s458
      %s462 = sphi 0, %s461
      %s478 = sphi 0, %s462
      %s484 = sphi 0, %s486
      %s487 = sphi 0, %s484
      %s488 = sphi 0, %s487
      %s504 = sphi 0, %s488
    $region4: #{tpu_custom_call.1} parent=1 // loop_header_branch
      %43 = sbr.rel (%p41) target = $region8
    $region5: #{tpu_custom_call.1} parent=1 // loop_body
      %s45 = ssub.s32 %s40, 1
      %s46 = ssub.s32 %s40, 2
      %s53 = sadd.s32 1, %s48
      %p54 = scmp.ge.s32.totalorder %s53, 2
      %s55 = scalar_select %p54, 0, %s53
      %s56 = sadd.s32 1, %s47
      %s57 = scalar_select %p54, %s56, %s47
      %p58 = scmp.ge.s32.totalorder %s57, 2
      %s59 = scalar_select %p58, 0, %s57
      %s60 = ssub.s32 %s47, %s59
      %p61 = scmp.eq.s32.totalorder %s60, 0
      %s63 = sadd.s32 %s62, 1
      %s64 = scalar_select %p61, %s62, %s63
      %p67 = pneg %p61
      %p68 = scmp.eq.s32.totalorder %s40, 3
      %p69 = por %p67, %p68
      %p70 = scmp.ne.s32.totalorder %s62, %s65
      %p71 = scmp.eq.s32.totalorder %s40, 0
      %p72 = por %p70, %p71
      %p73 = scmp.ne.s32.totalorder %s62, %s65
      %p74 = scmp.eq.s32.totalorder %s45, 3
      %p75 = por %p73, %p74
      %p76 = scmp.ne.s32.totalorder %s65, %s66
      %p77 = scmp.eq.s32.totalorder %s45, 0
      %p78 = por %p76, %p77
      %p79 = scmp.ne.s32.totalorder %s65, %s66
      %p80 = scmp.eq.s32.totalorder %s46, 3
      %p81 = por %p79, %p80
      %p83 = scmp.ne.s32.totalorder %s66, %s82
      %p84 = scmp.eq.s32.totalorder %s46, 0
      %p85 = por %p83, %p84
      %s87 = sadd.s32 %s86, 1
      %p90 = scmp.eq.s32.totalorder %s40, 3
      %p91 = scmp.ne.s32.totalorder %s86, %s88
      %p92 = scmp.eq.s32.totalorder %s40, 0
      %p93 = por %p91, %p92
      %p94 = scmp.ne.s32.totalorder %s86, %s88
      %p95 = scmp.eq.s32.totalorder %s45, 3
      %p96 = por %p94, %p95
      %p97 = scmp.ne.s32.totalorder %s88, %s89
      %p98 = scmp.eq.s32.totalorder %s45, 0
      %p99 = por %p97, %p98
      %p100 = scmp.ne.s32.totalorder %s88, %s89
      %p101 = scmp.eq.s32.totalorder %s46, 3
      %p102 = por %p100, %p101
      %p104 = scmp.ne.s32.totalorder %s89, %s103
      %p105 = scmp.eq.s32.totalorder %s46, 0
      %p106 = por %p104, %p105
      %s108 = sadd.s32 %s107, 1
      %p111 = scmp.eq.s32.totalorder %s40, 3
      %p112 = scmp.ne.s32.totalorder %s107, %s109
      %p113 = scmp.eq.s32.totalorder %s40, 0
      %p114 = por %p112, %p113
      %p115 = scmp.ne.s32.totalorder %s107, %s109
      %p116 = scmp.eq.s32.totalorder %s45, 3
      %p117 = por %p115, %p116
      %p118 = scmp.ne.s32.totalorder %s109, %s110
      %p119 = scmp.eq.s32.totalorder %s45, 0
      %p120 = por %p118, %p119
      %p121 = scmp.ne.s32.totalorder %s109, %s110
      %p122 = scmp.eq.s32.totalorder %s46, 3
      %p123 = por %p121, %p122
      %p125 = scmp.ne.s32.totalorder %s110, %s124
      %p126 = scmp.eq.s32.totalorder %s46, 0
      %p127 = por %p125, %p126
      %s129 = sadd.s32 %s128, 1
      %p132 = scmp.eq.s32.totalorder %s40, 3
      %p133 = scmp.ne.s32.totalorder %s128, %s130
      %p134 = scmp.eq.s32.totalorder %s40, 0
      %p135 = por %p133, %p134
      %p136 = scmp.ne.s32.totalorder %s128, %s130
      %p137 = scmp.eq.s32.totalorder %s45, 3
      %p138 = por %p136, %p137
      %p139 = scmp.ne.s32.totalorder %s130, %s131
      %p140 = scmp.eq.s32.totalorder %s45, 0
      %p141 = por %p139, %p140
      %p142 = scmp.ne.s32.totalorder %s130, %s131
      %p143 = scmp.eq.s32.totalorder %s46, 3
      %p144 = por %p142, %p143
      %p146 = scmp.ne.s32.totalorder %s131, %s145
      %p147 = scmp.eq.s32.totalorder %s46, 0
      %p148 = por %p146, %p147
      %s150 = sadd.s32 %s149, 1
      %p153 = scmp.eq.s32.totalorder %s40, 3
      %p154 = scmp.ne.s32.totalorder %s149, %s151
      %p155 = scmp.eq.s32.totalorder %s40, 0
      %p156 = por %p154, %p155
      %p157 = scmp.ne.s32.totalorder %s149, %s151
      %p158 = scmp.eq.s32.totalorder %s45, 3
      %p159 = por %p157, %p158
      %p160 = scmp.ne.s32.totalorder %s151, %s152
      %p161 = scmp.eq.s32.totalorder %s45, 0
      %p162 = por %p160, %p161
      %p163 = scmp.ne.s32.totalorder %s151, %s152
      %p164 = scmp.eq.s32.totalorder %s46, 3
      %p165 = por %p163, %p164
      %p167 = scmp.ne.s32.totalorder %s152, %s166
      %p168 = scmp.eq.s32.totalorder %s46, 0
      %p169 = por %p167, %p168
      %s170 = ssub.s32 %s48, %s55
      %p171 = scmp.eq.s32.totalorder %s170, 0
      %s173 = sadd.s32 %s172, 1
      %s174 = scalar_select %p171, %s172, %s173
      %p177 = pneg %p171
      %p178 = scmp.eq.s32.totalorder %s40, 3
      %p179 = por %p177, %p178
      %p180 = scmp.ne.s32.totalorder %s172, %s175
      %p181 = scmp.eq.s32.totalorder %s40, 0
      %p182 = por %p180, %p181
      %p183 = scmp.ne.s32.totalorder %s172, %s175
      %p184 = scmp.eq.s32.totalorder %s45, 3
      %p185 = por %p183, %p184
      %p186 = scmp.ne.s32.totalorder %s175, %s176
      %p187 = scmp.eq.s32.totalorder %s45, 0
      %p188 = por %p186, %p187
      %p189 = scmp.ne.s32.totalorder %s175, %s176
      %p190 = scmp.eq.s32.totalorder %s46, 3
      %p191 = por %p189, %p190
      %p193 = scmp.ne.s32.totalorder %s176, %s192
      %p194 = scmp.eq.s32.totalorder %s46, 0
      %p195 = por %p193, %p194
      %s196 = ssub.s32 %s48, %s55
      %p197 = scmp.eq.s32.totalorder %s196, 0
      %s199 = sadd.s32 %s198, 1
      %s200 = scalar_select %p197, %s198, %s199
      %p203 = pneg %p197
      %p204 = scmp.eq.s32.totalorder %s40, 3
      %p205 = por %p203, %p204
      %p206 = scmp.ne.s32.totalorder %s198, %s201
      %p207 = scmp.eq.s32.totalorder %s40, 0
      %p208 = por %p206, %p207
      %p209 = scmp.ne.s32.totalorder %s198, %s201
      %p210 = scmp.eq.s32.totalorder %s45, 3
      %p211 = por %p209, %p210
      %p212 = scmp.ne.s32.totalorder %s201, %s202
      %p213 = scmp.eq.s32.totalorder %s45, 0
      %p214 = por %p212, %p213
      %p215 = scmp.ne.s32.totalorder %s201, %s202
      %p216 = scmp.eq.s32.totalorder %s46, 3
      %p217 = por %p215, %p216
      %p219 = scmp.ne.s32.totalorder %s202, %s218
      %p220 = scmp.eq.s32.totalorder %s46, 0
      %p221 = por %p219, %p220
      %s222 = ssub.s32 %s48, %s55
      %p223 = scmp.eq.s32.totalorder %s222, 0
      %s225 = sadd.s32 %s224, 1
      %s226 = scalar_select %p223, %s224, %s225
      %p229 = pneg %p223
      %p230 = scmp.eq.s32.totalorder %s40, 3
      %p231 = por %p229, %p230
      %p232 = scmp.ne.s32.totalorder %s224, %s227
      %p233 = scmp.eq.s32.totalorder %s40, 0
      %p234 = por %p232, %p233
      %p235 = scmp.ne.s32.totalorder %s224, %s227
      %p236 = scmp.eq.s32.totalorder %s45, 3
      %p237 = por %p235, %p236
      %p238 = scmp.ne.s32.totalorder %s227, %s228
      %p239 = scmp.eq.s32.totalorder %s45, 0
      %p240 = por %p238, %p239
      %p241 = scmp.ne.s32.totalorder %s227, %s228
      %p242 = scmp.eq.s32.totalorder %s46, 3
      %p243 = por %p241, %p242
      %p245 = scmp.ne.s32.totalorder %s228, %s244
      %p246 = scmp.eq.s32.totalorder %s46, 0
      %p247 = por %p245, %p246
      %s248 = ssub.s32 %s48, %s55
      %p249 = scmp.eq.s32.totalorder %s248, 0
      %s251 = sadd.s32 %s250, 1
      %s252 = scalar_select %p249, %s250, %s251
      %p255 = pneg %p249
      %p256 = scmp.eq.s32.totalorder %s40, 3
      %p257 = por %p255, %p256
      %p258 = scmp.ne.s32.totalorder %s250, %s253
      %p259 = scmp.eq.s32.totalorder %s40, 0
      %p260 = por %p258, %p259
      %p261 = scmp.ne.s32.totalorder %s250, %s253
      %p262 = scmp.eq.s32.totalorder %s45, 3
      %p263 = por %p261, %p262
      %p264 = scmp.ne.s32.totalorder %s253, %s254
      %p265 = scmp.eq.s32.totalorder %s45, 0
      %p266 = por %p264, %p265
      %p267 = scmp.ne.s32.totalorder %s253, %s254
      %p268 = scmp.eq.s32.totalorder %s46, 3
      %p269 = por %p267, %p268
      %p271 = scmp.ne.s32.totalorder %s254, %s270
      %p272 = scmp.eq.s32.totalorder %s46, 0
      %p273 = por %p271, %p272
      %s274 = ssub.s32 %s48, %s55
      %p275 = scmp.eq.s32.totalorder %s274, 0
      %s277 = sadd.s32 %s276, 1
      %s278 = scalar_select %p275, %s276, %s277
      %p281 = pneg %p275
      %p282 = scmp.eq.s32.totalorder %s40, 3
      %p283 = por %p281, %p282
      %p284 = scmp.ne.s32.totalorder %s276, %s279
      %p285 = scmp.eq.s32.totalorder %s40, 0
      %p286 = por %p284, %p285
      %p287 = scmp.ne.s32.totalorder %s276, %s279
      %p288 = scmp.eq.s32.totalorder %s45, 3
      %p289 = por %p287, %p288
      %p290 = scmp.ne.s32.totalorder %s279, %s280
      %p291 = scmp.eq.s32.totalorder %s45, 0
      %p292 = por %p290, %p291
      %p293 = scmp.ne.s32.totalorder %s279, %s280
      %p294 = scmp.eq.s32.totalorder %s46, 3
      %p295 = por %p293, %p294
      %p297 = scmp.ne.s32.totalorder %s280, %s296
      %p298 = scmp.eq.s32.totalorder %s46, 0
      %p299 = por %p297, %p298
      %s300 = ssub.s32 %s48, %s55
      %p301 = scmp.eq.s32.totalorder %s300, 0
      %s303 = sadd.s32 %s302, 1
      %s304 = scalar_select %p301, %s302, %s303
      %p307 = pneg %p301
      %p308 = scmp.eq.s32.totalorder %s40, 3
      %p309 = por %p307, %p308
      %p310 = scmp.ne.s32.totalorder %s302, %s305
      %p311 = scmp.eq.s32.totalorder %s40, 0
      %p312 = por %p310, %p311
      %p313 = scmp.ne.s32.totalorder %s302, %s305
      %p314 = scmp.eq.s32.totalorder %s45, 3
      %p315 = por %p313, %p314
      %p316 = scmp.ne.s32.totalorder %s305, %s306
      %p317 = scmp.eq.s32.totalorder %s45, 0
      %p318 = por %p316, %p317
      %p319 = scmp.ne.s32.totalorder %s305, %s306
      %p320 = scmp.eq.s32.totalorder %s46, 3
      %p321 = por %p319, %p320
      %p323 = scmp.ne.s32.totalorder %s306, %s322
      %p324 = scmp.eq.s32.totalorder %s46, 0
      %p325 = por %p323, %p324
      %s326 = ssub.s32 %s48, %s55
      %p327 = scmp.eq.s32.totalorder %s326, 0
      %s329 = sadd.s32 %s328, 1
      %s330 = scalar_select %p327, %s328, %s329
      %p333 = pneg %p327
      %p334 = scmp.eq.s32.totalorder %s40, 3
      %p335 = por %p333, %p334
      %p336 = scmp.ne.s32.totalorder %s328, %s331
      %p337 = scmp.eq.s32.totalorder %s40, 0
      %p338 = por %p336, %p337
      %p339 = scmp.ne.s32.totalorder %s328, %s331
      %p340 = scmp.eq.s32.totalorder %s45, 3
      %p341 = por %p339, %p340
      %p342 = scmp.ne.s32.totalorder %s331, %s332
      %p343 = scmp.eq.s32.totalorder %s45, 0
      %p344 = por %p342, %p343
      %p345 = scmp.ne.s32.totalorder %s331, %s332
      %p346 = scmp.eq.s32.totalorder %s46, 3
      %p347 = por %p345, %p346
      %p349 = scmp.ne.s32.totalorder %s332, %s348
      %p350 = scmp.eq.s32.totalorder %s46, 0
      %p351 = por %p349, %p350
      %s352 = ssub.s32 %s48, %s55
      %p353 = scmp.eq.s32.totalorder %s352, 0
      %s355 = sadd.s32 %s354, 1
      %s356 = scalar_select %p353, %s354, %s355
      %p359 = pneg %p353
      %p360 = scmp.eq.s32.totalorder %s40, 3
      %p361 = por %p359, %p360
      %p362 = scmp.ne.s32.totalorder %s354, %s357
      %p363 = scmp.eq.s32.totalorder %s40, 0
      %p364 = por %p362, %p363
      %p365 = scmp.ne.s32.totalorder %s354, %s357
      %p366 = scmp.eq.s32.totalorder %s45, 3
      %p367 = por %p365, %p366
      %p368 = scmp.ne.s32.totalorder %s357, %s358
      %p369 = scmp.eq.s32.totalorder %s45, 0
      %p370 = por %p368, %p369
      %p371 = scmp.ne.s32.totalorder %s357, %s358
      %p372 = scmp.eq.s32.totalorder %s46, 3
      %p373 = por %p371, %p372
      %p375 = scmp.ne.s32.totalorder %s358, %s374
      %p376 = scmp.eq.s32.totalorder %s46, 0
      %p377 = por %p375, %p376
      %s378 = ssub.s32 %s48, %s55
      %p379 = scmp.eq.s32.totalorder %s378, 0
      %s381 = sadd.s32 %s380, 1
      %s382 = scalar_select %p379, %s380, %s381
      %p385 = pneg %p379
      %p386 = scmp.eq.s32.totalorder %s40, 3
      %p387 = por %p385, %p386
      %p388 = scmp.ne.s32.totalorder %s380, %s383
      %p389 = scmp.eq.s32.totalorder %s40, 0
      %p390 = por %p388, %p389
      %p391 = scmp.ne.s32.totalorder %s380, %s383
      %p392 = scmp.eq.s32.totalorder %s45, 3
      %p393 = por %p391, %p392
      %p394 = scmp.ne.s32.totalorder %s383, %s384
      %p395 = scmp.eq.s32.totalorder %s45, 0
      %p396 = por %p394, %p395
      %p397 = scmp.ne.s32.totalorder %s383, %s384
      %p398 = scmp.eq.s32.totalorder %s46, 3
      %p399 = por %p397, %p398
      %p401 = scmp.ne.s32.totalorder %s384, %s400
      %p402 = scmp.eq.s32.totalorder %s46, 0
      %p403 = por %p401, %p402
      %s404 = ssub.s32 %s48, %s55
      %p405 = scmp.eq.s32.totalorder %s404, 0
      %s407 = sadd.s32 %s406, 1
      %s408 = scalar_select %p405, %s406, %s407
      %p411 = pneg %p405
      %p412 = scmp.eq.s32.totalorder %s40, 3
      %p413 = por %p411, %p412
      %p414 = scmp.ne.s32.totalorder %s406, %s409
      %p415 = scmp.eq.s32.totalorder %s40, 0
      %p416 = por %p414, %p415
      %p417 = scmp.ne.s32.totalorder %s406, %s409
      %p418 = scmp.eq.s32.totalorder %s45, 3
      %p419 = por %p417, %p418
      %p420 = scmp.ne.s32.totalorder %s409, %s410
      %p421 = scmp.eq.s32.totalorder %s45, 0
      %p422 = por %p420, %p421
      %p423 = scmp.ne.s32.totalorder %s409, %s410
      %p424 = scmp.eq.s32.totalorder %s46, 3
      %p425 = por %p423, %p424
      %p427 = scmp.ne.s32.totalorder %s410, %s426
      %p428 = scmp.eq.s32.totalorder %s46, 0
      %p429 = por %p427, %p428
      %s430 = ssub.s32 %s48, %s55
      %p431 = scmp.eq.s32.totalorder %s430, 0
      %s433 = sadd.s32 %s432, 1
      %s434 = scalar_select %p431, %s432, %s433
      %p437 = pneg %p431
      %p438 = scmp.eq.s32.totalorder %s40, 3
      %p439 = por %p437, %p438
      %p440 = scmp.ne.s32.totalorder %s432, %s435
      %p441 = scmp.eq.s32.totalorder %s40, 0
      %p442 = por %p440, %p441
      %p443 = scmp.ne.s32.totalorder %s432, %s435
      %p444 = scmp.eq.s32.totalorder %s45, 3
      %p445 = por %p443, %p444
      %p446 = scmp.ne.s32.totalorder %s435, %s436
      %p447 = scmp.eq.s32.totalorder %s45, 0
      %p448 = por %p446, %p447
      %p449 = scmp.ne.s32.totalorder %s435, %s436
      %p450 = scmp.eq.s32.totalorder %s46, 3
      %p451 = por %p449, %p450
      %p453 = scmp.ne.s32.totalorder %s436, %s452
      %p454 = scmp.eq.s32.totalorder %s46, 0
      %p455 = por %p453, %p454
      %s456 = ssub.s32 %s48, %s55
      %p457 = scmp.eq.s32.totalorder %s456, 0
      %s459 = sadd.s32 %s458, 1
      %s460 = scalar_select %p457, %s458, %s459
      %p463 = pneg %p457
      %p464 = scmp.eq.s32.totalorder %s40, 3
      %p465 = por %p463, %p464
      %p466 = scmp.ne.s32.totalorder %s458, %s461
      %p467 = scmp.eq.s32.totalorder %s40, 0
      %p468 = por %p466, %p467
      %p469 = scmp.ne.s32.totalorder %s458, %s461
      %p470 = scmp.eq.s32.totalorder %s45, 3
      %p471 = por %p469, %p470
      %p472 = scmp.ne.s32.totalorder %s461, %s462
      %p473 = scmp.eq.s32.totalorder %s45, 0
      %p474 = por %p472, %p473
      %p475 = scmp.ne.s32.totalorder %s461, %s462
      %p476 = scmp.eq.s32.totalorder %s46, 3
      %p477 = por %p475, %p476
      %p479 = scmp.ne.s32.totalorder %s462, %s478
      %p480 = scmp.eq.s32.totalorder %s46, 0
      %p481 = por %p479, %p480
      %s482 = ssub.s32 %s47, %s59
      %p483 = scmp.eq.s32.totalorder %s482, 0
      %s485 = sadd.s32 %s484, 1
      %s486 = scalar_select %p483, %s484, %s485
      %p489 = pneg %p483
      %p490 = scmp.eq.s32.totalorder %s40, 3
      %p491 = por %p489, %p490
      %p492 = scmp.ne.s32.totalorder %s484, %s487
      %p493 = scmp.eq.s32.totalorder %s40, 0
      %p494 = por %p492, %p493
      %p495 = scmp.ne.s32.totalorder %s484, %s487
      %p496 = scmp.eq.s32.totalorder %s45, 3
      %p497 = por %p495, %p496
      %p498 = scmp.ne.s32.totalorder %s487, %s488
      %p499 = scmp.eq.s32.totalorder %s45, 0
      %p500 = por %p498, %p499
      %p501 = scmp.ne.s32.totalorder %s487, %s488
      %p502 = scmp.eq.s32.totalorder %s46, 3
      %p503 = por %p501, %p502
      %p505 = scmp.ne.s32.totalorder %s488, %s504
      %p506 = scmp.eq.s32.totalorder %s46, 0
      %p507 = por %p505, %p506
      %p508 = scmp.le.s32.totalorder 1, %s40
      %p509 = scmp.lt.s32.totalorder %s40, 5
      %p510 = pnand %p508, %p509
      %p511 = pneg %p510
      // Predicated region
      $region9: #{tpu_custom_call.1} parent=5 // pred_check
        _
      $region10: #{tpu_custom_call.1} parent=5 // pred_check_branch
        %513 = sbr.rel (%p510) target = $region12
      $region11: #{tpu_custom_call.1} parent=5 // pred_region
        %s514 = ssub.s32 %s40, 1
        // Predicated region
        $region13: #{tpu_custom_call.1} parent=11 // pred_check
          %p515 = pneg %p99
        $region14: #{tpu_custom_call.1} parent=11 // pred_check_branch
          %517 = sbr.rel (%p515) target = $region16
        $region15: #{tpu_custom_call.1} parent=11 // pred_region
          %s519 = ssub.s32 128, 128
          %520 = vsyncadd [#allocation4], %s519
          %s522 = sshll.u32 [#allocation3], 4
          %s523 = int_to_ptr.vmem [resolvable:$true] %s522
          %525 = dma.hbm_to_vmem [thread:$0]  %s1, 128, %s523, [#allocation4]
        $region16: #{tpu_custom_call.1} parent=11 // pred_fallthru
          _
        // Predicated region
        $region17: #{tpu_custom_call.1} parent=11 // pred_check
          %p526 = pneg %p120
        $region18: #{tpu_custom_call.1} parent=11 // pred_check_branch
          %528 = sbr.rel (%p526) target = $region20
        $region19: #{tpu_custom_call.1} parent=11 // pred_region
          %s530 = ssub.s32 128, 128
          %531 = vsyncadd [#allocation7], %s530
          %s533 = sshll.u32 [#allocation6], 4
          %s534 = int_to_ptr.vmem [resolvable:$true] %s533
          %536 = dma.hbm_to_vmem [thread:$0]  %s2, 128, %s534, [#allocation7]
        $region20: #{tpu_custom_call.1} parent=11 // pred_fallthru
          _
        // Predicated region
        $region21: #{tpu_custom_call.1} parent=11 // pred_check
          %p537 = pneg %p141
        $region22: #{tpu_custom_call.1} parent=11 // pred_check_branch
          %539 = sbr.rel (%p537) target = $region24
        $region23: #{tpu_custom_call.1} parent=11 // pred_region
          _
        $region24: #{tpu_custom_call.1} parent=11 // pred_fallthru
          _
        // Predicated region
        $region25: #{tpu_custom_call.1} parent=11 // pred_check
          %p540 = pneg %p162
        $region26: #{tpu_custom_call.1} parent=11 // pred_check_branch
          %542 = sbr.rel (%p540) target = $region28
        $region27: #{tpu_custom_call.1} parent=11 // pred_region
          %s544 = ssub.s32 256, 256
          %545 = vsyncadd [#allocation7], %s544
          %s546 = sshll.u32 [#allocation8], 4
          %s547 = int_to_ptr.vmem [resolvable:$true] %s546
          %552 = dma.hbm_to_vmem [thread:$0]  %s4, 256, %s547, [#allocation7], 64, 64, 4
        $region28: #{tpu_custom_call.1} parent=11 // pred_fallthru
          _
      $region12: #{tpu_custom_call.1} parent=5 // pred_fallthru
        _
      %p553 = scmp.lt.s32.totalorder %s40, 4
      // Predicated region
      $region29: #{tpu_custom_call.1} parent=5 // pred_check
        %p554 = pneg %p553
      $region30: #{tpu_custom_call.1} parent=5 // pred_check_branch
        %556 = sbr.rel (%p554) target = $region32
      $region31: #{tpu_custom_call.1} parent=5 // pred_region
        // Predicated region
        $region33: #{tpu_custom_call.1} parent=31 // pred_check
          %p557 = pneg %p72
        $region34: #{tpu_custom_call.1} parent=31 // pred_check_branch
          %559 = sbr.rel (%p557) target = $region36
        $region35: #{tpu_custom_call.1} parent=31 // pred_region
          %p560 = scmp.lt.s32.totalorder %s47, 1
          %s561 = scalar_select %p560, %s47, 1
          %s562 = smul.addr %s561, 8
          %s563 = scalar_lea.vmem %s0, %s562
        $region36: #{tpu_custom_call.1} parent=31 // pred_fallthru
          _
        // Predicated region
        $region37: #{tpu_custom_call.1} parent=31 // pred_check
          %p564 = pneg %p182
        $region38: #{tpu_custom_call.1} parent=31 // pred_check_branch
          %566 = sbr.rel (%p564) target = $region40
        $region39: #{tpu_custom_call.1} parent=31 // pred_region
          %p567 = scmp.lt.s32.totalorder %s48, 1
          %s568 = scalar_select %p567, %s48, 1
          %s569 = smul.addr %s568, 8
          %s570 = smul.addr %s569, 4
          %s571 = scalar_lea.vmem %s5, %s570
        $region40: #{tpu_custom_call.1} parent=31 // pred_fallthru
          _
        // Predicated region
        $region41: #{tpu_custom_call.1} parent=31 // pred_check
          %p572 = pneg %p208
        $region42: #{tpu_custom_call.1} parent=31 // pred_check_branch
          %574 = sbr.rel (%p572) target = $region44
        $region43: #{tpu_custom_call.1} parent=31 // pred_region
          %s575 = sand.u32 %s40, 1
          %s576 = scalar_lea.sflag [#allocation10], %s575
          %s577 = sand.u32 %s198, 1
          %s578 = smul.addr %s577, 2
          %s579 = scalar_lea.vmem [#allocation9], %s578
          %s581 = ssub.s32 32, 32
          %582 = vsyncadd %s576, %s581
          %s583 = smul.addr %s48, 2
          %s584 = smul.addr %s583, 16
          %s585 = scalar_lea.hbm %s6, %s584
          %s587 = sshll.u32 %s579, 4
          %s588 = int_to_ptr.vmem [resolvable:$true] %s587
          %590 = dma.hbm_to_vmem [thread:$0]  %s585, 32, %s588, %s576
        $region44: #{tpu_custom_call.1} parent=31 // pred_fallthru
          _
        // Predicated region
        $region45: #{tpu_custom_call.1} parent=31 // pred_check
          %p591 = pneg %p234
        $region46: #{tpu_custom_call.1} parent=31 // pred_check_branch
          %593 = sbr.rel (%p591) target = $region48
        $region47: #{tpu_custom_call.1} parent=31 // pred_region
          %s594 = sand.u32 %s40, 1
          %s595 = scalar_lea.sflag [#allocation10], %s594
          %s596 = sand.u32 %s224, 1
          %s597 = smul.addr %s596, 16
          %s598 = scalar_lea.vmem [#allocation11], %s597
          %s600 = ssub.s32 256, 256
          %601 = vsyncadd %s595, %s600
          %s602 = smul.addr %s48, 4
          %s603 = smul.addr %s602, 64
          %s604 = scalar_lea.hbm %s7, %s603
          %s605 = sshll.u32 %s598, 4
          %s606 = int_to_ptr.vmem [resolvable:$true] %s605
          %611 = dma.hbm_to_vmem [thread:$0]  %s604, 256, %s606, %s595, 64, 64, 4
        $region48: #{tpu_custom_call.1} parent=31 // pred_fallthru
          _
        // Predicated region
        $region49: #{tpu_custom_call.1} parent=31 // pred_check
          %p612 = pneg %p260
        $region50: #{tpu_custom_call.1} parent=31 // pred_check_branch
          %614 = sbr.rel (%p612) target = $region52
        $region51: #{tpu_custom_call.1} parent=31 // pred_region
          %s615 = sand.u32 %s40, 1
          %s616 = scalar_lea.sflag [#allocation13], %s615
          %s617 = sand.u32 %s250, 1
          %s618 = scalar_lea.vmem [#allocation12], %s617
          %s620 = ssub.s32 16, 16
          %621 = vsyncadd %s616, %s620
          %s622 = smul.addr %s48, 16
          %s623 = scalar_lea.hbm %s8, %s622
          %s625 = sshll.u32 %s618, 4
          %s626 = int_to_ptr.vmem [resolvable:$true] %s625
          %628 = dma.hbm_to_vmem [thread:$0]  %s623, 16, %s626, %s616
        $region52: #{tpu_custom_call.1} parent=31 // pred_fallthru
          _
        // Predicated region
        $region53: #{tpu_custom_call.1} parent=31 // pred_check
          %p629 = pneg %p286
        $region54: #{tpu_custom_call.1} parent=31 // pred_check_branch
          %631 = sbr.rel (%p629) target = $region56
        $region55: #{tpu_custom_call.1} parent=31 // pred_region
          %s632 = sand.u32 %s40, 1
          %s633 = scalar_lea.sflag [#allocation13], %s632
          %s634 = sand.u32 %s276, 1
          %s635 = scalar_lea.vmem [#allocation14], %s634
          %s637 = ssub.s32 16, 16
          %638 = vsyncadd %s633, %s637
          %s639 = smul.addr %s48, 16
          %s640 = scalar_lea.hbm %s9, %s639
          %s642 = sshll.u32 %s635, 4
          %s643 = int_to_ptr.vmem [resolvable:$true] %s642
          %645 = dma.hbm_to_vmem [thread:$0]  %s640, 16, %s643, %s633
        $region56: #{tpu_custom_call.1} parent=31 // pred_fallthru
          _
        // Predicated region
        $region57: #{tpu_custom_call.1} parent=31 // pred_check
          %p646 = pneg %p312
        $region58: #{tpu_custom_call.1} parent=31 // pred_check_branch
          %648 = sbr.rel (%p646) target = $region60
        $region59: #{tpu_custom_call.1} parent=31 // pred_region
          %s649 = sand.u32 %s40, 1
          %s650 = scalar_lea.sflag [#allocation16], %s649
          %s651 = sand.u32 %s302, 1
          %s652 = scalar_lea.vmem [#allocation15], %s651
          %s654 = ssub.s32 16, 16
          %655 = vsyncadd %s650, %s654
          %s656 = smul.addr %s48, 16
          %s657 = scalar_lea.hbm %s10, %s656
          %s659 = sshll.u32 %s652, 4
          %s660 = int_to_ptr.vmem [resolvable:$true] %s659
          %662 = dma.hbm_to_vmem [thread:$0]  %s657, 16, %s660, %s650
        $region60: #{tpu_custom_call.1} parent=31 // pred_fallthru
          _
        // Predicated region
        $region61: #{tpu_custom_call.1} parent=31 // pred_check
          %p663 = pneg %p338
        $region62: #{tpu_custom_call.1} parent=31 // pred_check_branch
          %665 = sbr.rel (%p663) target = $region64
        $region63: #{tpu_custom_call.1} parent=31 // pred_region
          %s666 = sand.u32 %s40, 1
          %s667 = scalar_lea.sflag [#allocation16], %s666
          %s668 = sand.u32 %s328, 1
          %s669 = smul.addr %s668, 16
          %s670 = scalar_lea.vmem [#allocation17], %s669
          %s672 = ssub.s32 256, 256
          %673 = vsyncadd %s667, %s672
          %s674 = smul.addr %s48, 4
          %s675 = smul.addr %s674, 64
          %s676 = scalar_lea.hbm %s11, %s675
          %s677 = sshll.u32 %s670, 4
          %s678 = int_to_ptr.vmem [resolvable:$true] %s677
          %683 = dma.hbm_to_vmem [thread:$0]  %s676, 256, %s678, %s667, 64, 64, 4
        $region64: #{tpu_custom_call.1} parent=31 // pred_fallthru
          _
        // Predicated region
        $region65: #{tpu_custom_call.1} parent=31 // pred_check
          %p684 = pneg %p364
        $region66: #{tpu_custom_call.1} parent=31 // pred_check_branch
          %686 = sbr.rel (%p684) target = $region68
        $region67: #{tpu_custom_call.1} parent=31 // pred_region
          %s687 = sand.u32 %s354, 1
          %s688 = scalar_lea.sflag [#allocation19], %s687
          %s689 = sand.u32 %s354, 1
          %s690 = scalar_lea.vmem [#allocation18], %s689
          %s692 = ssub.s32 16, 16
          %693 = vsyncadd %s688, %s692
          %s694 = smul.addr %s48, 16
          %s695 = scalar_lea.hbm %s12, %s694
          %s697 = sshll.u32 %s690, 4
          %s698 = int_to_ptr.vmem [resolvable:$true] %s697
          %700 = dma.hbm_to_vmem [thread:$0]  %s695, 16, %s698, %s688
        $region68: #{tpu_custom_call.1} parent=31 // pred_fallthru
          _
        // Predicated region
        $region69: #{tpu_custom_call.1} parent=31 // pred_check
          %p701 = pneg %p390
        $region70: #{tpu_custom_call.1} parent=31 // pred_check_branch
          %703 = sbr.rel (%p701) target = $region72
        $region71: #{tpu_custom_call.1} parent=31 // pred_region
          %p704 = scmp.lt.s32.totalorder %s48, 1
          %s705 = scalar_select %p704, %s48, 1
          %s706 = smul.addr %s705, 8
          %s707 = smul.addr %s706, 4
          %s708 = scalar_lea.vmem %s13, %s707
        $region72: #{tpu_custom_call.1} parent=31 // pred_fallthru
          _
        // Predicated region
        $region73: #{tpu_custom_call.1} parent=31 // pred_check
          %p709 = pneg %p416
        $region74: #{tpu_custom_call.1} parent=31 // pred_check_branch
          %711 = sbr.rel (%p709) target = $region76
        $region75: #{tpu_custom_call.1} parent=31 // pred_region
          %p712 = scmp.lt.s32.totalorder %s48, 1
          %s713 = scalar_select %p712, %s48, 1
          %s714 = scalar_lea.vmem %s14, %s713
        $region76: #{tpu_custom_call.1} parent=31 // pred_fallthru
          _
        // Predicated region
        $region77: #{tpu_custom_call.1} parent=31 // pred_check
          %p715 = pneg %p442
        $region78: #{tpu_custom_call.1} parent=31 // pred_check_branch
          %717 = sbr.rel (%p715) target = $region80
        $region79: #{tpu_custom_call.1} parent=31 // pred_region
          %p718 = scmp.lt.s32.totalorder %s48, 1
          %s719 = scalar_select %p718, %s48, 1
          %s720 = scalar_lea.vmem %s15, %s719
        $region80: #{tpu_custom_call.1} parent=31 // pred_fallthru
          _
        // Predicated region
        $region81: #{tpu_custom_call.1} parent=31 // pred_check
          %p721 = pneg %p468
        $region82: #{tpu_custom_call.1} parent=31 // pred_check_branch
          %723 = sbr.rel (%p721) target = $region84
        $region83: #{tpu_custom_call.1} parent=31 // pred_region
          %p724 = scmp.lt.s32.totalorder %s48, 1
          %s725 = scalar_select %p724, %s48, 1
          %s726 = scalar_lea.vmem %s16, %s725
        $region84: #{tpu_custom_call.1} parent=31 // pred_fallthru
          _
      $region32: #{tpu_custom_call.1} parent=5 // pred_fallthru
        _
      %p727 = scmp.le.s32.totalorder 1, %s40
      %p728 = scmp.lt.s32.totalorder %s40, 5
      %p729 = pnand %p727, %p728
      %p730 = pneg %p729
      // Predicated region
      $region85: #{tpu_custom_call.1} parent=5 // pred_check
        _
      $region86: #{tpu_custom_call.1} parent=5 // pred_check_branch
        %732 = sbr.rel (%p729) target = $region88
      $region87: #{tpu_custom_call.1} parent=5 // pred_region
        %s733 = ssub.s32 %s40, 1
        // Predicated region
        $region89: #{tpu_custom_call.1} parent=87 // pred_check
          %p734 = pneg %p99
        $region90: #{tpu_custom_call.1} parent=87 // pred_check_branch
          %736 = sbr.rel (%p734) target = $region92
        $region91: #{tpu_custom_call.1} parent=87 // pred_region
          %737 = dma.done [#allocation4], 128
        $region92: #{tpu_custom_call.1} parent=87 // pred_fallthru
          _
        // Predicated region
        $region93: #{tpu_custom_call.1} parent=87 // pred_check
          %p738 = pneg %p120
        $region94: #{tpu_custom_call.1} parent=87 // pred_check_branch
          %740 = sbr.rel (%p738) target = $region96
        $region95: #{tpu_custom_call.1} parent=87 // pred_region
          %741 = dma.done [#allocation7], 128
        $region96: #{tpu_custom_call.1} parent=87 // pred_fallthru
          _
        // Predicated region
        $region97: #{tpu_custom_call.1} parent=87 // pred_check
          %p742 = pneg %p162
        $region98: #{tpu_custom_call.1} parent=87 // pred_check_branch
          %744 = sbr.rel (%p742) target = $region100
        $region99: #{tpu_custom_call.1} parent=87 // pred_region
          %745 = dma.done [#allocation7], 256
        $region100: #{tpu_custom_call.1} parent=87 // pred_fallthru
          _
        %s746 = sand.u32 %s45, 1
        %s747 = scalar_lea.sflag [#allocation10], %s746
        %s748 = sand.u32 %s201, 1
        %s749 = smul.addr %s748, 2
        %s750 = scalar_lea.vmem [#allocation9], %s749
        // Predicated region
        $region101: #{tpu_custom_call.1} parent=87 // pred_check
          %p751 = pneg %p214
        $region102: #{tpu_custom_call.1} parent=87 // pred_check_branch
          %753 = sbr.rel (%p751) target = $region104
        $region103: #{tpu_custom_call.1} parent=87 // pred_region
          %754 = dma.done %s747, 32
        $region104: #{tpu_custom_call.1} parent=87 // pred_fallthru
          _
        %s755 = sand.u32 %s45, 1
        %s756 = scalar_lea.sflag [#allocation10], %s755
        %s757 = sand.u32 %s227, 1
        %s758 = smul.addr %s757, 16
        %s759 = scalar_lea.vmem [#allocation11], %s758
        // Predicated region
        $region105: #{tpu_custom_call.1} parent=87 // pred_check
          %p760 = pneg %p240
        $region106: #{tpu_custom_call.1} parent=87 // pred_check_branch
          %762 = sbr.rel (%p760) target = $region108
        $region107: #{tpu_custom_call.1} parent=87 // pred_region
          %763 = dma.done %s756, 256
        $region108: #{tpu_custom_call.1} parent=87 // pred_fallthru
          _
        %s764 = sand.u32 %s45, 1
        %s765 = scalar_lea.sflag [#allocation13], %s764
        %s766 = sand.u32 %s253, 1
        %s767 = scalar_lea.vmem [#allocation12], %s766
        // Predicated region
        $region109: #{tpu_custom_call.1} parent=87 // pred_check
          %p768 = pneg %p266
        $region110: #{tpu_custom_call.1} parent=87 // pred_check_branch
          %770 = sbr.rel (%p768) target = $region112
        $region111: #{tpu_custom_call.1} parent=87 // pred_region
          %771 = dma.done %s765, 16
        $region112: #{tpu_custom_call.1} parent=87 // pred_fallthru
          _
        %s772 = sand.u32 %s45, 1
        %s773 = scalar_lea.sflag [#allocation13], %s772
        %s774 = sand.u32 %s279, 1
        %s775 = scalar_lea.vmem [#allocation14], %s774
        // Predicated region
        $region113: #{tpu_custom_call.1} parent=87 // pred_check
          %p776 = pneg %p292
        $region114: #{tpu_custom_call.1} parent=87 // pred_check_branch
          %778 = sbr.rel (%p776) target = $region116
        $region115: #{tpu_custom_call.1} parent=87 // pred_region
          %779 = dma.done %s773, 16
        $region116: #{tpu_custom_call.1} parent=87 // pred_fallthru
          _
        %s780 = sand.u32 %s45, 1
        %s781 = scalar_lea.sflag [#allocation16], %s780
        %s782 = sand.u32 %s305, 1
        %s783 = scalar_lea.vmem [#allocation15], %s782
        // Predicated region
        $region117: #{tpu_custom_call.1} parent=87 // pred_check
          %p784 = pneg %p318
        $region118: #{tpu_custom_call.1} parent=87 // pred_check_branch
          %786 = sbr.rel (%p784) target = $region120
        $region119: #{tpu_custom_call.1} parent=87 // pred_region
          %787 = dma.done %s781, 16
        $region120: #{tpu_custom_call.1} parent=87 // pred_fallthru
          _
        %s788 = sand.u32 %s45, 1
        %s789 = scalar_lea.sflag [#allocation16], %s788
        %s790 = sand.u32 %s331, 1
        %s791 = smul.addr %s790, 16
        %s792 = scalar_lea.vmem [#allocation17], %s791
        // Predicated region
        $region121: #{tpu_custom_call.1} parent=87 // pred_check
          %p793 = pneg %p344
        $region122: #{tpu_custom_call.1} parent=87 // pred_check_branch
          %795 = sbr.rel (%p793) target = $region124
        $region123: #{tpu_custom_call.1} parent=87 // pred_region
          %796 = dma.done %s789, 256
        $region124: #{tpu_custom_call.1} parent=87 // pred_fallthru
          _
        %s797 = sand.u32 %s357, 1
        %s798 = scalar_lea.sflag [#allocation19], %s797
        %s799 = sand.u32 %s357, 1
        %s800 = scalar_lea.vmem [#allocation18], %s799
        // Predicated region
        $region125: #{tpu_custom_call.1} parent=87 // pred_check
          %p801 = pneg %p370
        $region126: #{tpu_custom_call.1} parent=87 // pred_check_branch
          %803 = sbr.rel (%p801) target = $region128
        $region127: #{tpu_custom_call.1} parent=87 // pred_region
          %804 = dma.done %s798, 16
        $region128: #{tpu_custom_call.1} parent=87 // pred_fallthru
          _
        %p805 = scmp.lt.s32.totalorder %s49, 1
        %s806 = scalar_select %p805, %s49, 1
        %s807 = smul.addr %s806, 8
        %s808 = scalar_lea.vmem %s0, %s807
        %p809 = pneg %p78
        %p810 = pneg %p75
        %p811 = pneg %p99
        %p812 = pneg %p96
        %p813 = pneg %p120
        %p814 = pneg %p117
        %p815 = pneg %p141
        %p816 = pneg %p138
        %p817 = pneg %p162
        %p818 = pneg %p159
        %p819 = scmp.lt.s32.totalorder %s50, 1
        %s820 = scalar_select %p819, %s50, 1
        %s821 = smul.addr %s820, 8
        %s822 = smul.addr %s821, 4
        %s823 = scalar_lea.vmem %s5, %s822
        %p824 = pneg %p188
        %p825 = pneg %p185
        %s826 = sand.u32 %s45, 1
        %s827 = scalar_lea.sflag [#allocation10], %s826
        %s828 = sand.u32 %s201, 1
        %s829 = smul.addr %s828, 2
        %s830 = scalar_lea.vmem [#allocation9], %s829
        %p831 = pneg %p214
        %p832 = pneg %p211
        %s833 = sand.u32 %s45, 1
        %s834 = scalar_lea.sflag [#allocation10], %s833
        %s835 = sand.u32 %s227, 1
        %s836 = smul.addr %s835, 16
        %s837 = scalar_lea.vmem [#allocation11], %s836
        %p838 = pneg %p240
        %p839 = pneg %p237
        %s840 = sand.u32 %s45, 1
        %s841 = scalar_lea.sflag [#allocation13], %s840
        %s842 = sand.u32 %s253, 1
        %s843 = scalar_lea.vmem [#allocation12], %s842
        %p844 = pneg %p266
        %p845 = pneg %p263
        %s846 = sand.u32 %s45, 1
        %s847 = scalar_lea.sflag [#allocation13], %s846
        %s848 = sand.u32 %s279, 1
        %s849 = scalar_lea.vmem [#allocation14], %s848
        %p850 = pneg %p292
        %p851 = pneg %p289
        %s852 = sand.u32 %s45, 1
        %s853 = scalar_lea.sflag [#allocation16], %s852
        %s854 = sand.u32 %s305, 1
        %s855 = scalar_lea.vmem [#allocation15], %s854
        %p856 = pneg %p318
        %p857 = pneg %p315
        %s858 = sand.u32 %s45, 1
        %s859 = scalar_lea.sflag [#allocation16], %s858
        %s860 = sand.u32 %s331, 1
        %s861 = smul.addr %s860, 16
        %s862 = scalar_lea.vmem [#allocation17], %s861
        %p863 = pneg %p344
        %p864 = pneg %p341
        %s865 = sand.u32 %s357, 1
        %s866 = scalar_lea.sflag [#allocation19], %s865
        %s867 = sand.u32 %s357, 1
        %s868 = scalar_lea.vmem [#allocation18], %s867
        %p869 = pneg %p370
        %p870 = pneg %p367
        %p871 = scmp.lt.s32.totalorder %s50, 1
        %s872 = scalar_select %p871, %s50, 1
        %s873 = smul.addr %s872, 8
        %s874 = smul.addr %s873, 4
        %s875 = scalar_lea.vmem %s13, %s874
        %p876 = pneg %p396
        %p877 = pneg %p393
        %p878 = scmp.lt.s32.totalorder %s50, 1
        %s879 = scalar_select %p878, %s50, 1
        %s880 = scalar_lea.vmem %s14, %s879
        %p881 = pneg %p422
        %p882 = pneg %p419
        %p883 = scmp.lt.s32.totalorder %s50, 1
        %s884 = scalar_select %p883, %s50, 1
        %s885 = scalar_lea.vmem %s15, %s884
        %p886 = pneg %p448
        %p887 = pneg %p445
        %p888 = scmp.lt.s32.totalorder %s50, 1
        %s889 = scalar_select %p888, %s50, 1
        %s890 = scalar_lea.vmem %s16, %s889
        %p891 = pneg %p474
        %p892 = pneg %p471
        %p893 = pneg %p500
        %p894 = pneg %p497
        %s895 = sand.u32 %s487, 1
        %s896 = scalar_lea.sflag [#allocation5], %s895
        %s897 = sand.u32 %s487, 1
        %s898 = smul.addr %s897, 8
        %s899 = scalar_lea.vmem [#allocation20], %s898
        %p900 = scmp.lt.s32.totalorder %s49, 1
        %s901 = scalar_select %p900, %s49, 1
        %s902 = smul.addr %s901, 8
        %s903 = scalar_lea.vmem %s0, %s902
        %p904 = scmp.lt.s32.totalorder %s50, 1
        %s905 = scalar_select %p904, %s50, 1
        %s906 = smul.addr %s905, 8
        %s907 = smul.addr %s906, 4
        %s908 = scalar_lea.vmem %s5, %s907
        %p909 = scmp.lt.s32.totalorder %s50, 1
        %s910 = scalar_select %p909, %s50, 1
        %s911 = smul.addr %s910, 8
        %s912 = smul.addr %s911, 4
        %s913 = scalar_lea.vmem %s13, %s912
        %p914 = scmp.lt.s32.totalorder %s50, 1
        %s915 = scalar_select %p914, %s50, 1
        %s916 = scalar_lea.vmem %s14, %s915
        %p917 = scmp.lt.s32.totalorder %s50, 1
        %s918 = scalar_select %p917, %s50, 1
        %s919 = scalar_lea.vmem %s15, %s918
        %p920 = scmp.lt.s32.totalorder %s50, 1
        %s921 = scalar_select %p920, %s50, 1
        %s922 = scalar_lea.vmem %s16, %s921
        %p924 = scmp.eq.s32.totalorder %s50, 0
        // Predicated region
        $region129: #{tpu_custom_call.1} parent=87 // pred_check
          %p925 = pneg %p924
        $region130: #{tpu_custom_call.1} parent=87 // pred_check_branch
          %927 = sbr.rel (%p925) target = $region132
        $region131: #{tpu_custom_call.1} parent=87 // pred_region
          %v928 = vld [vmem:[%s903] sm:$0xff]
          %vm929 = vcmask 261120
          %930 = vst.msk [vmem:[#allocation2] sm:$0xff] %vm929, %v928
        $region132: #{tpu_custom_call.1} parent=87 // pred_fallthru
          _
        %v931 = vld [vmem:[#allocation2] sm:$0xff]
        %v932 = vld [vmem:[%s908] sm:$0xff]
        %v933 = vld [vmem:[%s908 + $0x8] sm:$0xff]
        %v934 = vld [vmem:[%s908 + $0x10] sm:$0xff]
        %v935 = vld [vmem:[%s908 + $0x18] sm:$0xff]
        %v936 = vpack.c.bf16 %v931, %v931
        %v937 = vld [vmem:[%s750] sm:$0x3]
        %v939 = vlaneseq
        %v940 = vshrl.u32 %v939, 7
        %v941 = vsub.s32 0, %v940
        %v942 = vrot.slane %v937, %v941
        %v943 = vlaneseq
        %v944 = vshrl.u32 %v943, 7
        %v945 = vsub.s32 1, %v944
        %v946 = vrot.slane %v937, %v945
        %v953 = vunpack.c.l.b16 %v932
        %v954 = vunpack.c.h.b16 %v932
        %v955 = vunpack.c.l.b16 %v933
        %v956 = vunpack.c.h.b16 %v933
        %v957 = vunpack.c.l.b16 %v934
        %v958 = vunpack.c.h.b16 %v934
        %v959 = vunpack.c.l.b16 %v935
        %v960 = vunpack.c.h.b16 %v935
        %v961 = vpack.c.b16 %v955, %v953
        %v962 = vpack.c.b16 %v956, %v954
        %v963 = vpack.c.b16 %v959, %v957
        %v964 = vpack.c.b16 %v960, %v958
        %vm969 = vcmask 261120
        %v971 = vsel %vm969, %v936, 0
        %973 = vmatprep.subr.bf16.mxu0 %v962
        %974 = vmatpush1.bf16.msra.mxu0 %v961
        %975 = vmatprep.subr.bf16.mxu0 %v964
        %976 = vmatpush1.bf16.msra.mxu0 %v963
        %977 = vmatprep.subr.bf16.mxu0 0
        %978 = vmatpush1.bf16.msra.mxu0 0
        %979 = vmatprep.subr.bf16.mxu0 0
        %980 = vmatpush1.bf16.msra.mxu0 0
        %981 = vmatprep.subr.bf16.mxu0 0
        %982 = vmatpush1.bf16.msra.mxu0 0
        %983 = vmatprep.subr.bf16.mxu0 0
        %984 = vmatpush1.bf16.msra.mxu0 0
        %985 = vmatprep.subr.bf16.mxu0 0
        %986 = vmatpush1.bf16.msra.mxu0 0
        %987 = vmatprep.subr.bf16.mxu0 0
        %988 = vmatpush1.bf16.msra.mxu0 0
        %989 = vmatprep.subr.bf16.mxu0 0
        %990 = vmatpush1.bf16.msra.mxu0 0
        %991 = vmatprep.subr.bf16.mxu0 0
        %992 = vmatpush1.bf16.msra.mxu0 0
        %993 = vmatprep.subr.bf16.mxu0 0
        %994 = vmatpush1.bf16.msra.mxu0 0
        %995 = vmatprep.subr.bf16.mxu0 0
        %996 = vmatpush1.bf16.msra.mxu0 0
        %997 = vmatprep.subr.bf16.mxu0 0
        %998 = vmatpush1.bf16.msra.mxu0 0
        %999 = vmatprep.subr.bf16.mxu0 0
        %1000 = vmatpush1.bf16.msra.mxu0 0
        %1001 = vmatprep.subr.bf16.mxu0 0
        %1002 = vmatpush1.bf16.msra.mxu0 0
        %1003 = vmatprep.subr.bf16.mxu0 0
        %1004 = vmatpush1.bf16.msra.mxu0 0
        %1005 = vmatprep.mubr.bf16.mxu0 0
        %1006 = vmatmul.mubr.bf16.gmra.mrb[0].mxu0 %v971
        %v1007 = vpop.f32.mrb[0].mxu0
        %v1008 = vadd.f32 %v942, %v1007
        %v1009 = vpop.f32.mrb[0].mxu0
        %v1010 = vadd.f32 %v946, %v1009
        %v1011 = vpop.f32.mrb[0].mxu0
        %v1012 = vpop.f32.mrb[0].mxu0
        %1013 = vdwg.mxu0
        %v1014 = vld [vmem:[#allocation3] sm:$0xff]
        %v1015 = vld [vmem:[#allocation6] sm:$0xff]
        %v1016 = vmul.f32 %v1008, %v1014
        %1018 = vrot.lane.b32.xlu0 %v1015, 32
        %v1019 = vpop.permute.xlu0 %1018
        %v1021 = vmul.f32 %v1008, %v1019
        %1023 = vrot.lane.b32.xlu0 %v1021, 96
        %v1024 = vpop.permute.xlu0 %1023
        %v1026 = vadd.f32 %v1016, %v1024
        %1028 = vrot.lane.b32.xlu0 %v1014, 64
        %v1029 = vpop.permute.xlu0 %1028
        %v1031 = vmul.f32 %v1008, %v1029
        %1032 = vrot.lane.b32.xlu0 %v1015, 96
        %v1033 = vpop.permute.xlu0 %1032
        %v1035 = vmul.f32 %v1008, %v1033
        %1037 = vrot.lane.b32.xlu0 %v1035, 96
        %v1038 = vpop.permute.xlu0 %1037
        %v1040 = vadd.f32 %v1031, %v1038
        %v1041 = vld [vmem:[%s3] sm:$0xff]
        %v1042 = vld [vmem:[%s3 + $0x8] sm:$0xff]
        %v1043 = vld [vmem:[%s3 + $0x10] sm:$0xff]
        %v1044 = vld [vmem:[%s3 + $0x18] sm:$0xff]
        %1049 = vrot.lane.b32.xlu0 %v1041, 64
        %v1050 = vpop.permute.xlu0 %1049
        %1051 = vrot.lane.b32.xlu0 %v1042, 64
        %v1052 = vpop.permute.xlu0 %1051
        %1053 = vrot.lane.b32.xlu0 %v1043, 64
        %v1054 = vpop.permute.xlu0 %1053
        %1055 = vrot.lane.b32.xlu0 %v1044, 64
        %v1056 = vpop.permute.xlu0 %1055
        %v1061 = vmul.f32 %v1040, %v1050
        %v1062 = vmul.f32 %v1040, %v1052
        %v1063 = vmul.f32 %v1040, %v1054
        %v1064 = vmul.f32 %v1040, %v1056
        %v1065 = vmul.f32 %v1010, %v1041
        %v1066 = vmul.f32 %v1010, %v1042
        %v1067 = vmul.f32 %v1010, %v1043
        %v1068 = vmul.f32 %v1010, %v1044
        %v1069 = vpack.c.bf16 %v1026, %v1026
        %v1070 = vpack.c.bf16 %v1062, %v1061
        %v1071 = vpack.c.bf16 %v1064, %v1063
        %1074 = vrot.lane.b32.xlu0 %v1070, 64
        %v1075 = vpop.permute.xlu0 %1074
        %1076 = vrot.lane.b32.xlu0 %v1071, 64
        %v1077 = vpop.permute.xlu0 %1076
        %v1079 = vsel %vm969, %v1069, 0
        %v1082 = vsel %vm969, %v1075, 0
        %v1085 = vsel %vm969, %v1077, 0
        %1087 = vmatprep.subr.bf16.mxu0 0
        %1088 = vmatpush1.bf16.xpose.msra.mxu0 %v1082
        %1089 = vmatprep.subr.bf16.mxu0 0
        %1090 = vmatpush1.bf16.xpose.msra.mxu0 %v1085
        %1091 = vmatprep.subr.bf16.mxu0 0
        %1092 = vmatpush1.bf16.xpose.msra.mxu0 0
        %1093 = vmatprep.subr.bf16.mxu0 0
        %1094 = vmatpush1.bf16.xpose.msra.mxu0 0
        %1095 = vmatprep.subr.bf16.mxu0 0
        %1096 = vmatpush1.bf16.xpose.msra.mxu0 0
        %1097 = vmatprep.subr.bf16.mxu0 0
        %1098 = vmatpush1.bf16.xpose.msra.mxu0 0
        %1099 = vmatprep.subr.bf16.mxu0 0
        %1100 = vmatpush1.bf16.xpose.msra.mxu0 0
        %1101 = vmatprep.subr.bf16.mxu0 0
        %1102 = vmatpush1.bf16.xpose.msra.mxu0 0
        %1103 = vmatprep.subr.bf16.mxu0 0
        %1104 = vmatpush1.bf16.xpose.msra.mxu0 0
        %1105 = vmatprep.subr.bf16.mxu0 0
        %1106 = vmatpush1.bf16.xpose.msra.mxu0 0
        %1107 = vmatprep.subr.bf16.mxu0 0
        %1108 = vmatpush1.bf16.xpose.msra.mxu0 0
        %1109 = vmatprep.subr.bf16.mxu0 0
        %1110 = vmatpush1.bf16.xpose.msra.mxu0 0
        %1111 = vmatprep.subr.bf16.mxu0 0
        %1112 = vmatpush1.bf16.xpose.msra.mxu0 0
        %1113 = vmatprep.subr.bf16.mxu0 0
        %1114 = vmatpush1.bf16.xpose.msra.mxu0 0
        %1115 = vmatprep.subr.bf16.mxu0 0
        %1116 = vmatpush1.bf16.xpose.msra.mxu0 0
        %1117 = vmatprep.subr.bf16.mxu0 0
        %1118 = vmatpush1.bf16.xpose.msra.mxu0 0
        %1119 = vmatprep.mubr.bf16.mxu0 0
        %1120 = vmatmul.mubr.bf16.gmra.mrb[0].mxu0 %v1079
        %v1121 = vpop.f32.mrb[0].mxu0
        %v1122 = vadd.f32 0.0, %v1121
        %v1123 = vpop.f32.mrb[0].mxu0
        %v1124 = vpop.f32.mrb[0].mxu0
        %v1125 = vpop.f32.mrb[0].mxu0
        %1126 = vdwg.mxu0
        %v1127 = vmul.f32 %v1122, 0.35355338
        %v1128 = vsel %vm969, %v1127, -inf
        %1129 = vmax.xlane.f32.xlu0 %v1128
        %v1130 = vpop.xlane.xlu0 %1129
        %v1131 = vsub.f32 %v1127, %v1130
        %v1132 = vmul.f32 %v1131, 1.442695
        %v1133 = vpow.pop %v1132
        %v1134 = vld [vmem:[#allocation8] sm:$0xf]
        %v1135 = vld [vmem:[#allocation8 + $0x4] sm:$0xf]
        %v1136 = vld [vmem:[#allocation8 + $0x8] sm:$0xf]
        %v1137 = vld [vmem:[#allocation8 + $0xc] sm:$0xf]
        %v1138 = vpack.c.bf16 %v1133, %v1133
        %v1143 = vunpack.c.l.b16 %v1134
        %v1144 = vunpack.c.l.b16 %v1135
        %v1145 = vunpack.c.l.b16 %v1136
        %v1146 = vunpack.c.l.b16 %v1137
        %v1147 = vpack.c.b16 %v1144, %v1143
        %v1148 = vpack.c.b16 %v1146, %v1145
        %v1152 = vsel %vm969, %v1138, 0
        %1154 = vmatprep.subr.bf16.mxu0 0
        %1155 = vmatpush1.bf16.msra.mxu0 %v1147
        %1156 = vmatprep.subr.bf16.mxu0 0
        %1157 = vmatpush1.bf16.msra.mxu0 %v1148
        %1158 = vmatprep.subr.bf16.mxu0 0
        %1159 = vmatpush1.bf16.msra.mxu0 0
        %1160 = vmatprep.subr.bf16.mxu0 0
        %1161 = vmatpush1.bf16.msra.mxu0 0
        %1162 = vmatprep.subr.bf16.mxu0 0
        %1163 = vmatpush1.bf16.msra.mxu0 0
        %1164 = vmatprep.subr.bf16.mxu0 0
        %1165 = vmatpush1.bf16.msra.mxu0 0
        %1166 = vmatprep.subr.bf16.mxu0 0
        %1167 = vmatpush1.bf16.msra.mxu0 0
        %1168 = vmatprep.subr.bf16.mxu0 0
        %1169 = vmatpush1.bf16.msra.mxu0 0
        %1170 = vmatprep.subr.bf16.mxu0 0
        %1171 = vmatpush1.bf16.msra.mxu0 0
        %1172 = vmatprep.subr.bf16.mxu0 0
        %1173 = vmatpush1.bf16.msra.mxu0 0
        %1174 = vmatprep.subr.bf16.mxu0 0
        %1175 = vmatpush1.bf16.msra.mxu0 0
        %1176 = vmatprep.subr.bf16.mxu0 0
        %1177 = vmatpush1.bf16.msra.mxu0 0
        %1178 = vmatprep.subr.bf16.mxu0 0
        %1179 = vmatpush1.bf16.msra.mxu0 0
        %1180 = vmatprep.subr.bf16.mxu0 0
        %1181 = vmatpush1.bf16.msra.mxu0 0
        %1182 = vmatprep.subr.bf16.mxu0 0
        %1183 = vmatpush1.bf16.msra.mxu0 0
        %1184 = vmatprep.subr.bf16.mxu0 0
        %1185 = vmatpush1.bf16.msra.mxu0 0
        %1186 = vmatprep.mubr.bf16.mxu0 0
        %1187 = vmatmul.mubr.bf16.gmra.mrb[0].mxu0 %v1152
        %v1188 = vpop.f32.mrb[0].mxu0
        %v1189 = vadd.f32 0.0, %v1188
        %v1190 = vpop.f32.mrb[0].mxu0
        %v1191 = vpop.f32.mrb[0].mxu0
        %v1192 = vpop.f32.mrb[0].mxu0
        %1193 = vdwg.mxu0
        %v1194 = vrcp.pop %v1189
        %v1195 = vmul.f32 %v1189, %v1194
        %v1196 = vsub.f32 2.0, %v1195
        %v1197 = vmul.f32 %v1194, %v1196
        %v1198 = vmul.f32 %v1133, %v1197
        %v1199 = vpack.c.bf16 %v1198, %v1198
        %v1200 = vpack.c.bf16 %v1066, %v1065
        %v1201 = vpack.c.bf16 %v1068, %v1067
        %v1203 = vsel %vm969, %v1199, 0
        %1205 = vmatprep.subr.bf16.mxu0 0
        %1206 = vmatpush1.bf16.msra.mxu0 %v1200
        %1207 = vmatprep.subr.bf16.mxu0 0
        %1208 = vmatpush1.bf16.msra.mxu0 %v1201
        %1209 = vmatprep.subr.bf16.mxu0 0
        %1210 = vmatpush1.bf16.msra.mxu0 0
        %1211 = vmatprep.subr.bf16.mxu0 0
        %1212 = vmatpush1.bf16.msra.mxu0 0
        %1213 = vmatprep.subr.bf16.mxu0 0
        %1214 = vmatpush1.bf16.msra.mxu0 0
        %1215 = vmatprep.subr.bf16.mxu0 0
        %1216 = vmatpush1.bf16.msra.mxu0 0
        %1217 = vmatprep.subr.bf16.mxu0 0
        %1218 = vmatpush1.bf16.msra.mxu0 0
        %1219 = vmatprep.subr.bf16.mxu0 0
        %1220 = vmatpush1.bf16.msra.mxu0 0
        %1221 = vmatprep.subr.bf16.mxu0 0
        %1222 = vmatpush1.bf16.msra.mxu0 0
        %1223 = vmatprep.subr.bf16.mxu0 0
        %1224 = vmatpush1.bf16.msra.mxu0 0
        %1225 = vmatprep.subr.bf16.mxu0 0
        %1226 = vmatpush1.bf16.msra.mxu0 0
        %1227 = vmatprep.subr.bf16.mxu0 0
        %1228 = vmatpush1.bf16.msra.mxu0 0
        %1229 = vmatprep.subr.bf16.mxu0 0
        %1230 = vmatpush1.bf16.msra.mxu0 0
        %1231 = vmatprep.subr.bf16.mxu0 0
        %1232 = vmatpush1.bf16.msra.mxu0 0
        %1233 = vmatprep.subr.bf16.mxu0 0
        %1234 = vmatpush1.bf16.msra.mxu0 0
        %1235 = vmatprep.subr.bf16.mxu0 0
        %1236 = vmatpush1.bf16.msra.mxu0 0
        %1237 = vmatprep.mubr.bf16.mxu0 0
        %1238 = vmatmul.mubr.bf16.gmra.mrb[0].mxu0 %v1203
        %v1239 = vpop.f32.mrb[0].mxu0
        %v1240 = vadd.f32 0.0, %v1239
        %v1241 = vpop.f32.mrb[0].mxu0
        %v1242 = vpop.f32.mrb[0].mxu0
        %v1243 = vpop.f32.mrb[0].mxu0
        %1244 = vdwg.mxu0
        %v1245 = vld [vmem:[%s759] sm:$0xf]
        %v1246 = vld [vmem:[%s759 + $0x4] sm:$0xf]
        %v1247 = vld [vmem:[%s759 + $0x8] sm:$0xf]
        %v1248 = vld [vmem:[%s759 + $0xc] sm:$0xf]
        %v1249 = vpack.c.bf16 %v1240, %v1240
        %v1250 = vld [vmem:[%s767] sm:$0x1]
        %v1252 = vlaneseq
        %v1253 = vshrl.u32 %v1252, 7
        %v1254 = vsub.s32 0, %v1253
        %v1255 = vrot.slane %v1250, %v1254
        %v1261 = vunpack.c.l.b16 %v1245
        %v1262 = vunpack.c.l.b16 %v1246
        %v1263 = vunpack.c.l.b16 %v1247
        %v1264 = vunpack.c.l.b16 %v1248
        %v1265 = vpack.c.b16 %v1262, %v1261
        %v1266 = vpack.c.b16 %v1264, %v1263
        %v1270 = vsel %vm969, %v1249, 0
        %1272 = vmatprep.subr.bf16.mxu0 0
        %1273 = vmatpush1.bf16.msra.mxu0 %v1265
        %1274 = vmatprep.subr.bf16.mxu0 0
        %1275 = vmatpush1.bf16.msra.mxu0 %v1266
        %1276 = vmatprep.subr.bf16.mxu0 0
        %1277 = vmatpush1.bf16.msra.mxu0 0
        %1278 = vmatprep.subr.bf16.mxu0 0
        %1279 = vmatpush1.bf16.msra.mxu0 0
        %1280 = vmatprep.subr.bf16.mxu0 0
        %1281 = vmatpush1.bf16.msra.mxu0 0
        %1282 = vmatprep.subr.bf16.mxu0 0
        %1283 = vmatpush1.bf16.msra.mxu0 0
        %1284 = vmatprep.subr.bf16.mxu0 0
        %1285 = vmatpush1.bf16.msra.mxu0 0
        %1286 = vmatprep.subr.bf16.mxu0 0
        %1287 = vmatpush1.bf16.msra.mxu0 0
        %1288 = vmatprep.subr.bf16.mxu0 0
        %1289 = vmatpush1.bf16.msra.mxu0 0
        %1290 = vmatprep.subr.bf16.mxu0 0
        %1291 = vmatpush1.bf16.msra.mxu0 0
        %1292 = vmatprep.subr.bf16.mxu0 0
        %1293 = vmatpush1.bf16.msra.mxu0 0
        %1294 = vmatprep.subr.bf16.mxu0 0
        %1295 = vmatpush1.bf16.msra.mxu0 0
        %1296 = vmatprep.subr.bf16.mxu0 0
        %1297 = vmatpush1.bf16.msra.mxu0 0
        %1298 = vmatprep.subr.bf16.mxu0 0
        %1299 = vmatpush1.bf16.msra.mxu0 0
        %1300 = vmatprep.subr.bf16.mxu0 0
        %1301 = vmatpush1.bf16.msra.mxu0 0
        %1302 = vmatprep.subr.bf16.mxu0 0
        %1303 = vmatpush1.bf16.msra.mxu0 0
        %1304 = vmatprep.mubr.bf16.mxu0 0
        %1305 = vmatmul.mubr.bf16.gmra.mrb[0].mxu0 %v1270
        %v1306 = vpop.f32.mrb[0].mxu0
        %v1307 = vadd.f32 %v1255, %v1306
        %v1308 = vpop.f32.mrb[0].mxu0
        %v1309 = vpop.f32.mrb[0].mxu0
        %v1310 = vpop.f32.mrb[0].mxu0
        %1311 = vdwg.mxu0
        %v1312 = vadd.f32 %v931, %v1307
        %v1313 = vld [vmem:[%s775] sm:$0x1]
        %v1314 = vld [vmem:[%s783] sm:$0x1]
        %v1315 = vsel %vm969, %v1312, 0.0
        %1316 = vadd.xlane.f32.xlu0 %v1315
        %v1317 = vpop.xlane.xlu0 %1316
        %v1318 = vrcp.pop 32.0
        %v1319 = vmul.f32 %v1317, %v1318
        %v1320 = vsub.f32 %v1312, %v1319
        %v1321 = vmul.f32 %v1320, %v1320
        %v1322 = vsel %vm969, %v1321, 0.0
        %1323 = vadd.xlane.f32.xlu0 %v1322
        %v1324 = vpop.xlane.xlu0 %1323
        %v1325 = vmul.f32 %v1324, %v1318
        %v1326 = vadd.f32 %v1325, 1e-05
        %v1327 = vrsqrt.pop %v1326
        %v1328 = vmul.f32 %v1320, %v1327
        %v1330 = vlaneseq
        %v1331 = vshrl.u32 %v1330, 7
        %v1332 = vsub.s32 0, %v1331
        %v1333 = vrot.slane %v1313, %v1332
        %v1335 = vmul.f32 %v1328, %v1333
        %v1337 = vlaneseq
        %v1338 = vshrl.u32 %v1337, 7
        %v1339 = vsub.s32 0, %v1338
        %v1340 = vrot.slane %v1314, %v1339
        %v1342 = vadd.f32 %v1335, %v1340
        %v1343 = vld [vmem:[%s792] sm:$0xf]
        %v1344 = vld [vmem:[%s792 + $0x4] sm:$0xf]
        %v1345 = vld [vmem:[%s792 + $0x8] sm:$0xf]
        %v1346 = vld [vmem:[%s792 + $0xc] sm:$0xf]
        %v1347 = vpack.c.bf16 %v1342, %v1342
        %v1348 = vld [vmem:[%s800] sm:$0x1]
        %v1350 = vlaneseq
        %v1351 = vshrl.u32 %v1350, 7
        %v1352 = vsub.s32 0, %v1351
        %v1353 = vrot.slane %v1348, %v1352
        %v1359 = vunpack.c.l.b16 %v1343
        %v1360 = vunpack.c.l.b16 %v1344
        %v1361 = vunpack.c.l.b16 %v1345
        %v1362 = vunpack.c.l.b16 %v1346
        %v1363 = vpack.c.b16 %v1360, %v1359
        %v1364 = vpack.c.b16 %v1362, %v1361
        %v1368 = vsel %vm969, %v1347, 0
        %1370 = vmatprep.subr.bf16.mxu0 0
        %1371 = vmatpush1.bf16.msra.mxu0 %v1363
        %1372 = vmatprep.subr.bf16.mxu0 0
        %1373 = vmatpush1.bf16.msra.mxu0 %v1364
        %1374 = vmatprep.subr.bf16.mxu0 0
        %1375 = vmatpush1.bf16.msra.mxu0 0
        %1376 = vmatprep.subr.bf16.mxu0 0
        %1377 = vmatpush1.bf16.msra.mxu0 0
        %1378 = vmatprep.subr.bf16.mxu0 0
        %1379 = vmatpush1.bf16.msra.mxu0 0
        %1380 = vmatprep.subr.bf16.mxu0 0
        %1381 = vmatpush1.bf16.msra.mxu0 0
        %1382 = vmatprep.subr.bf16.mxu0 0
        %1383 = vmatpush1.bf16.msra.mxu0 0
        %1384 = vmatprep.subr.bf16.mxu0 0
        %1385 = vmatpush1.bf16.msra.mxu0 0
        %1386 = vmatprep.subr.bf16.mxu0 0
        %1387 = vmatpush1.bf16.msra.mxu0 0
        %1388 = vmatprep.subr.bf16.mxu0 0
        %1389 = vmatpush1.bf16.msra.mxu0 0
        %1390 = vmatprep.subr.bf16.mxu0 0
        %1391 = vmatpush1.bf16.msra.mxu0 0
        %1392 = vmatprep.subr.bf16.mxu0 0
        %1393 = vmatpush1.bf16.msra.mxu0 0
        %1394 = vmatprep.subr.bf16.mxu0 0
        %1395 = vmatpush1.bf16.msra.mxu0 0
        %1396 = vmatprep.subr.bf16.mxu0 0
        %1397 = vmatpush1.bf16.msra.mxu0 0
        %1398 = vmatprep.subr.bf16.mxu0 0
        %1399 = vmatpush1.bf16.msra.mxu0 0
        %1400 = vmatprep.subr.bf16.mxu0 0
        %1401 = vmatpush1.bf16.msra.mxu0 0
        %1402 = vmatprep.mubr.bf16.mxu0 0
        %1403 = vmatmul.mubr.bf16.gmra.mrb[0].mxu0 %v1368
        %v1404 = vpop.f32.mrb[0].mxu0
        %v1405 = vadd.f32 %v1353, %v1404
        %v1406 = vpop.f32.mrb[0].mxu0
        %v1407 = vpop.f32.mrb[0].mxu0
        %v1408 = vpop.f32.mrb[0].mxu0
        %1409 = vdwg.mxu0
        %v1410 = vmax.f32 %v1405, 0.0
        %v1411 = vld [vmem:[%s913] sm:$0xf]
        %v1412 = vld [vmem:[%s913 + $0x4] sm:$0xf]
        %v1413 = vld [vmem:[%s913 + $0x8] sm:$0xf]
        %v1414 = vld [vmem:[%s913 + $0xc] sm:$0xf]
        %v1415 = vld [vmem:[%s913 + $0x10] sm:$0xf]
        %v1416 = vld [vmem:[%s913 + $0x14] sm:$0xf]
        %v1417 = vld [vmem:[%s913 + $0x18] sm:$0xf]
        %v1418 = vld [vmem:[%s913 + $0x1c] sm:$0xf]
        %v1419 = vpack.c.bf16 %v1410, %v1410
        %v1420 = vld [vmem:[%s916] sm:$0x1]
        %v1422 = vlaneseq
        %v1423 = vshrl.u32 %v1422, 7
        %v1424 = vsub.s32 0, %v1423
        %v1425 = vrot.slane %v1420, %v1424
        %v1435 = vunpack.c.l.b16 %v1411
        %v1436 = vunpack.c.l.b16 %v1412
        %v1437 = vunpack.c.l.b16 %v1413
        %v1438 = vunpack.c.l.b16 %v1414
        %v1439 = vunpack.c.l.b16 %v1415
        %v1440 = vunpack.c.l.b16 %v1416
        %v1441 = vunpack.c.l.b16 %v1417
        %v1442 = vunpack.c.l.b16 %v1418
        %v1443 = vpack.c.b16 %v1436, %v1435
        %v1444 = vpack.c.b16 %v1438, %v1437
        %v1445 = vpack.c.b16 %v1440, %v1439
        %v1446 = vpack.c.b16 %v1442, %v1441
        %vm1451 = vcmask 523264
        %v1453 = vsel %vm1451, %v1419, 0
        %1455 = vmatprep.subr.bf16.mxu0 0
        %1456 = vmatpush1.bf16.msra.mxu0 %v1443
        %1457 = vmatprep.subr.bf16.mxu0 0
        %1458 = vmatpush1.bf16.msra.mxu0 %v1444
        %1459 = vmatprep.subr.bf16.mxu0 0
        %1460 = vmatpush1.bf16.msra.mxu0 %v1445
        %1461 = vmatprep.subr.bf16.mxu0 0
        %1462 = vmatpush1.bf16.msra.mxu0 %v1446
        %1463 = vmatprep.subr.bf16.mxu0 0
        %1464 = vmatpush1.bf16.msra.mxu0 0
        %1465 = vmatprep.subr.bf16.mxu0 0
        %1466 = vmatpush1.bf16.msra.mxu0 0
        %1467 = vmatprep.subr.bf16.mxu0 0
        %1468 = vmatpush1.bf16.msra.mxu0 0
        %1469 = vmatprep.subr.bf16.mxu0 0
        %1470 = vmatpush1.bf16.msra.mxu0 0
        %1471 = vmatprep.subr.bf16.mxu0 0
        %1472 = vmatpush1.bf16.msra.mxu0 0
        %1473 = vmatprep.subr.bf16.mxu0 0
        %1474 = vmatpush1.bf16.msra.mxu0 0
        %1475 = vmatprep.subr.bf16.mxu0 0
        %1476 = vmatpush1.bf16.msra.mxu0 0
        %1477 = vmatprep.subr.bf16.mxu0 0
        %1478 = vmatpush1.bf16.msra.mxu0 0
        %1479 = vmatprep.subr.bf16.mxu0 0
        %1480 = vmatpush1.bf16.msra.mxu0 0
        %1481 = vmatprep.subr.bf16.mxu0 0
        %1482 = vmatpush1.bf16.msra.mxu0 0
        %1483 = vmatprep.subr.bf16.mxu0 0
        %1484 = vmatpush1.bf16.msra.mxu0 0
        %1485 = vmatprep.subr.bf16.mxu0 0
        %1486 = vmatpush1.bf16.msra.mxu0 0
        %1487 = vmatprep.mubr.bf16.mxu0 0
        %1488 = vmatmul.mubr.bf16.gmra.mrb[0].mxu0 %v1453
        %v1489 = vpop.f32.mrb[0].mxu0
        %v1490 = vadd.f32 %v1425, %v1489
        %v1491 = vpop.f32.mrb[0].mxu0
        %v1492 = vpop.f32.mrb[0].mxu0
        %v1493 = vpop.f32.mrb[0].mxu0
        %1494 = vdwg.mxu0
        %v1495 = vadd.f32 %v1342, %v1490
        %v1496 = vld [vmem:[%s919] sm:$0x1]
        %v1497 = vld [vmem:[%s922] sm:$0x1]
        %v1498 = vsel %vm969, %v1495, 0.0
        %1499 = vadd.xlane.f32.xlu0 %v1498
        %v1500 = vpop.xlane.xlu0 %1499
        %v1501 = vmul.f32 %v1500, %v1318
        %v1502 = vsub.f32 %v1495, %v1501
        %v1503 = vmul.f32 %v1502, %v1502
        %v1504 = vsel %vm969, %v1503, 0.0
        %1505 = vadd.xlane.f32.xlu0 %v1504
        %v1506 = vpop.xlane.xlu0 %1505
        %v1507 = vmul.f32 %v1506, %v1318
        %v1508 = vadd.f32 %v1507, 1e-05
        %v1509 = vrsqrt.pop %v1508
        %v1510 = vmul.f32 %v1502, %v1509
        %v1512 = vlaneseq
        %v1513 = vshrl.u32 %v1512, 7
        %v1514 = vsub.s32 0, %v1513
        %v1515 = vrot.slane %v1496, %v1514
        %v1517 = vmul.f32 %v1510, %v1515
        %v1519 = vlaneseq
        %v1520 = vshrl.u32 %v1519, 7
        %v1521 = vsub.s32 0, %v1520
        %v1522 = vrot.slane %v1497, %v1521
        %v1524 = vadd.f32 %v1517, %v1522
        %1525 = vst.msk [vmem:[#allocation2] sm:$0xff] %vm969, %v1524
        %p1526 = scmp.eq.s32.totalorder %s50, 1
        // Predicated region
        $region133: #{tpu_custom_call.1} parent=87 // pred_check
          %p1527 = pneg %p1526
        $region134: #{tpu_custom_call.1} parent=87 // pred_check_branch
          %1529 = sbr.rel (%p1527) target = $region136
        $region135: #{tpu_custom_call.1} parent=87 // pred_region
          %1530 = vst.msk [vmem:[%s899] sm:$0xff] %vm969, %v1524
        $region136: #{tpu_custom_call.1} parent=87 // pred_fallthru
          _
        %s1531 = sand.u32 %s487, 1
        %s1532 = scalar_lea.sflag [#allocation5], %s1531
        %s1533 = sand.u32 %s487, 1
        %s1534 = smul.addr %s1533, 8
        %s1535 = scalar_lea.vmem [#allocation20], %s1534
        // Predicated region
        $region137: #{tpu_custom_call.1} parent=87 // pred_check
          %p1536 = pneg %p497
        $region138: #{tpu_custom_call.1} parent=87 // pred_check_branch
          %1538 = sbr.rel (%p1536) target = $region140
        $region139: #{tpu_custom_call.1} parent=87 // pred_region
          %s1540 = ssub.s32 128, 128
          %1541 = vsyncadd %s1532, %s1540
          %s1542 = smul.addr %s49, 128
          %s1543 = scalar_lea.hbm %s17, %s1542
          %s1545 = sshll.u32 %s1535, 4
          %s1546 = int_to_ptr.vmem [resolvable:$true] %s1545
          %1548 = dma.vmem_to_hbm [thread:$0]  %s1546, 128, %s1543, %s1532
        $region140: #{tpu_custom_call.1} parent=87 // pred_fallthru
          _
      $region88: #{tpu_custom_call.1} parent=5 // pred_fallthru
        _
      %p1549 = scmp.le.s32.totalorder 2, %s40
      // Predicated region
      $region141: #{tpu_custom_call.1} parent=5 // pred_check
        %p1550 = pneg %p1549
      $region142: #{tpu_custom_call.1} parent=5 // pred_check_branch
        %1552 = sbr.rel (%p1550) target = $region144
      $region143: #{tpu_custom_call.1} parent=5 // pred_region
        %s1553 = ssub.s32 %s40, 2
        // Predicated region
        $region145: #{tpu_custom_call.1} parent=143 // pred_check
          %p1554 = pneg %p503
        $region146: #{tpu_custom_call.1} parent=143 // pred_check_branch
          %1556 = sbr.rel (%p1554) target = $region148
        $region147: #{tpu_custom_call.1} parent=143 // pred_region
          %s1557 = sand.u32 %s488, 1
          %s1558 = scalar_lea.sflag [#allocation5], %s1557
          %s1559 = sand.u32 %s488, 1
          %s1560 = smul.addr %s1559, 8
          %s1561 = scalar_lea.vmem [#allocation20], %s1560
          %1562 = dma.done %s1558, 128
        $region148: #{tpu_custom_call.1} parent=143 // pred_fallthru
          _
      $region144: #{tpu_custom_call.1} parent=5 // pred_fallthru
        _
    $region6: #{tpu_custom_call.1} parent=1 // loop_footer
      %s44 = sadd.s32 1, %s40
    $region7: #{tpu_custom_call.1} parent=1 // loop_footer_branch
      %39 = sbr.rel target = $region3
    $region8: #{tpu_custom_call.1} parent=1 // loop_exit
      _
    %1563 = vsyncpa [#allocation4], 1
    %s1564 = scalar_lea.sflag [#allocation4], 1
    %1565 = vsyncpa %s1564, 1
    %1566 = vsyncpa [#allocation7], 1
    %1567 = vsyncpa [#allocation10], 1
    %s1568 = scalar_lea.sflag [#allocation10], 1
    %1569 = vsyncpa %s1568, 1
    %1570 = vsyncpa [#allocation13], 1
    %s1571 = scalar_lea.sflag [#allocation13], 1
    %1572 = vsyncpa %s1571, 1
    %1573 = vsyncpa [#allocation16], 1
    %s1574 = scalar_lea.sflag [#allocation16], 1
    %1575 = vsyncpa %s1574, 1
    %1576 = vsyncpa [#allocation19], 1
    %s1577 = scalar_lea.sflag [#allocation19], 1
    %1578 = vsyncpa %s1577, 1
    %1579 = vsyncpa [#allocation5], 1
    %s1580 = scalar_lea.sflag [#allocation5], 1
    %1581 = vsyncpa %s1580, 1

</llo_original>
